<compile_context>
chip_gen: v7x
topology: tpu7x:2x2x1
jax: 0.10.0
libtpu: 0.0.40
codegen_flags: <defaults>
</compile_context>

<pallas_src>
import functools

import jax
import jax.numpy as jnp
from jax.experimental import pallas as pl
from jax.experimental.pallas import tpu as pltpu


def _lstm_kernel(x_ref, w0_ref, b0_ref, w1_ref, b1_ref, wlin_ref, blin_ref,
                 scores_ref, hn_ref, cn_ref):
    T, B, _ = x_ref.shape
    H4 = w0_ref.shape[1]
    H = H4 // 4

    # Resident weights / biases (loaded once, reused across the unrolled loop).
    w0 = w0_ref[...]
    b0 = b0_ref[...]
    w1 = w1_ref[...]
    b1 = b1_ref[...]

    # Gate order along the 4H lane axis is [i, f, o, g]: sigmoid on the first
    # 3H lanes, tanh on the last H lanes -> one whole-vreg select.
    lane = jax.lax.broadcasted_iota(jnp.int32, (B, H4), 1)
    sig_mask = lane < 3 * H

    def cell(x_in, h_prev, c_prev, w, b):
        xh = jnp.concatenate([x_in, h_prev], axis=1)
        gates = jnp.dot(xh, w, preferred_element_type=jnp.float32) + b
        act = jnp.where(sig_mask, jax.nn.sigmoid(gates), jnp.tanh(gates))
        i = act[:, 0 * H:1 * H]
        f = act[:, 1 * H:2 * H]
        o = act[:, 2 * H:3 * H]
        g = act[:, 3 * H:4 * H]
        c_new = f * c_prev + i * g
        h_new = o * jnp.tanh(c_new)
        return h_new, c_new

    def step(t, carry):
        h1, c1, h2, c2 = carry
        x_t = x_ref[t]                       # (B, D)
        h1, c1 = cell(x_t, h1, c1, w0, b0)   # layer 0
        h2, c2 = cell(h1, h2, c2, w1, b1)    # layer 1
        return (h1, c1, h2, c2)

    z = jnp.zeros((B, H), jnp.float32)
    h1, c1, h2, c2 = jax.lax.fori_loop(0, T, step, (z, z, z, z), unroll=True)

    # Linear head on top-layer hidden at last time step + log_softmax(dim=1).
    logits = (jnp.dot(h2, wlin_ref[...], preferred_element_type=jnp.float32)
              + blin_ref[...])
    m = jnp.max(logits, axis=-1, keepdims=True)
    s = logits - m
    lse = jnp.log(jnp.sum(jnp.exp(s), axis=-1, keepdims=True))
    scores_ref[...] = s - lse

    # hidden = (h_n, c_n), each (num_layers, B, H)
    hn_ref[0] = h1
    hn_ref[1] = h2
    cn_ref[0] = c1
    cn_ref[1] = c2


@jax.jit
def lstm_forward(x, w_ih0, w_hh0, b_ih0, b_hh0,
                 w_ih1, w_hh1, b_ih1, b_hh1, w_lin, b_lin):
    """Forward pass matching LSTM.forward(input) with hidden=None.

    Weights are in PyTorch layout: w_ih* (4H, in), w_hh* (4H, H), biases (4H,),
    w_lin (O, H), b_lin (O,). Gate order on the 4H axis is PyTorch's [i,f,g,o].
    """
    T, B, D = x.shape
    H = w_hh0.shape[1]
    O = w_lin.shape[0]

    # --- weight preparation (plain JAX, traced once under jit) -------------
    # Reorder gates [i,f,g,o] -> [i,f,o,g] so sigmoid covers the first 3H lanes.
    perm = jnp.concatenate([jnp.arange(0, 2 * H),
                            jnp.arange(3 * H, 4 * H),
                            jnp.arange(2 * H, 3 * H)])

    def prep(w_ih, w_hh, b_ih, b_hh):
        w = jnp.concatenate([w_ih, w_hh], axis=1)      # (4H, in+H)
        w = w[perm].T.astype(jnp.float32)              # (in+H, 4H), reordered
        b = (b_ih + b_hh)[perm].reshape(1, 4 * H).astype(jnp.float32)
        return w, b

    w0, b0 = prep(w_ih0, w_hh0, b_ih0, b_hh0)          # (D+H, 4H), (1, 4H)
    w1, b1 = prep(w_ih1, w_hh1, b_ih1, b_hh1)          # (2H, 4H), (1, 4H)
    wlin = w_lin.T.astype(jnp.float32)                 # (H, O)
    blin = b_lin.reshape(1, O).astype(jnp.float32)

    # Pad batch to the f32 sublane tile (8); sliced back after the kernel.
    B_pad = max(8, ((B + 7) // 8) * 8)
    x_p = jnp.pad(x.astype(jnp.float32), ((0, 0), (0, B_pad - B), (0, 0)))

    out_shape = (
        jax.ShapeDtypeStruct((B_pad, O), jnp.float32),       # genre_scores
        jax.ShapeDtypeStruct((2, B_pad, H), jnp.float32),    # h_n
        jax.ShapeDtypeStruct((2, B_pad, H), jnp.float32),    # c_n
    )

    grid_spec = pltpu.PrefetchScalarGridSpec(
        num_scalar_prefetch=0,
        grid=(1,),
        in_specs=[
            pl.BlockSpec((T, B_pad, D), lambda i: (0, 0, 0)),    # whole x
            pl.BlockSpec((D + H, 4 * H), lambda i: (0, 0)),      # stacked W layer 0
            pl.BlockSpec((1, 4 * H), lambda i: (0, 0)),          # bias layer 0
            pl.BlockSpec((2 * H, 4 * H), lambda i: (0, 0)),      # stacked W layer 1
            pl.BlockSpec((1, 4 * H), lambda i: (0, 0)),          # bias layer 1
            pl.BlockSpec((H, O), lambda i: (0, 0)),              # linear weight
            pl.BlockSpec((1, O), lambda i: (0, 0)),              # linear bias
        ],
        out_specs=[
            pl.BlockSpec((B_pad, O), lambda i: (0, 0)),
            pl.BlockSpec((2, B_pad, H), lambda i: (0, 0, 0)),
            pl.BlockSpec((2, B_pad, H), lambda i: (0, 0, 0)),
        ],
    )

    scores, hn, cn = pl.pallas_call(
        _lstm_kernel,
        out_shape=out_shape,
        grid_spec=grid_spec,
        compiler_params=pltpu.CompilerParams(
            dimension_semantics=("arbitrary",)),
    )(x_p, w0, b0, w1, b1, wlin, blin)

    # TODO(synk): for very large batch on v7x, add a "parallel" batch grid axis
    # so both TensorCores are used; unnecessary at these shapes.
    return scores[:B], hn[:, :B], cn[:, :B]


def _reference_forward(x, w_ih0, w_hh0, b_ih0, b_hh0,
                       w_ih1, w_hh1, b_ih1, b_hh1, w_lin, b_lin):
    """Pure-JAX reference with PyTorch nn.LSTM semantics (for verification)."""
    T, B, D = x.shape
    H = w_hh0.shape[1]

    def cell(x_in, h, c, w_ih, w_hh, b_ih, b_hh):
        g = x_in @ w_ih.T + h @ w_hh.T + b_ih + b_hh
        i = jax.nn.sigmoid(g[:, 0 * H:1 * H])
        f = jax.nn.sigmoid(g[:, 1 * H:2 * H])
        gg = jnp.tanh(g[:, 2 * H:3 * H])
        o = jax.nn.sigmoid(g[:, 3 * H:4 * H])
        c_new = f * c + i * gg
        return o * jnp.tanh(c_new), c_new

    h1 = jnp.zeros((B, H), jnp.float32)
    c1 = jnp.zeros((B, H), jnp.float32)
    h2 = jnp.zeros((B, H), jnp.float32)
    c2 = jnp.zeros((B, H), jnp.float32)
    for t in range(T):
        h1, c1 = cell(x[t], h1, c1, w_ih0, w_hh0, b_ih0, b_hh0)
        h2, c2 = cell(h1, h2, c2, w_ih1, w_hh1, b_ih1, b_hh1)
    logits = h2 @ w_lin.T + b_lin
    scores = jax.nn.log_softmax(logits, axis=1)
    return scores, jnp.stack([h1, h2]), jnp.stack([c1, c2])


if __name__ == "__main__":
    # input: (seq_len, batch, input_dim); hidden_dim=32, output_dim=8, num_layers=2
    T, B, D, H, O = 8, 4, 16, 32, 8

    key = jax.random.PRNGKey(0)
    ks = jax.random.split(key, 16)
    k_init = 1.0 / jnp.sqrt(H)

    def uni(k, shape):
        return jax.random.uniform(k, shape, jnp.float32, minval=-k_init, maxval=k_init)

    x = jax.random.normal(ks[0], (T, B, D), jnp.float32)

    # PyTorch-layout parameters.
    w_ih0 = uni(ks[1], (4 * H, D))
    w_hh0 = uni(ks[2], (4 * H, H))
    b_ih0 = uni(ks[3], (4 * H,))
    b_hh0 = uni(ks[4], (4 * H,))
    w_ih1 = uni(ks[5], (4 * H, H))
    w_hh1 = uni(ks[6], (4 * H, H))
    b_ih1 = uni(ks[7], (4 * H,))
    b_hh1 = uni(ks[8], (4 * H,))
    w_lin = uni(ks[9], (O, H))
    b_lin = uni(ks[10], (O,))

    args = (x, w_ih0, w_hh0, b_ih0, b_hh0,
            w_ih1, w_hh1, b_ih1, b_hh1, w_lin, b_lin)

    scores, hn, cn = lstm_forward(*args)
    jax.block_until_ready((scores, hn, cn))

    r_scores, r_hn, r_cn = _reference_forward(*args)
    assert jnp.allclose(scores, r_scores, atol=1e-4, rtol=1e-4)
    assert jnp.allclose(hn, r_hn, atol=1e-4, rtol=1e-4)
    assert jnp.allclose(cn, r_cn, atol=1e-4, rtol=1e-4)

    print("KERNEL_OK")
</pallas_src>

<mosaic_0001>
module attributes {stable_mosaic.version = 11 : i64} {
  func.func @_lstm_kernel(%arg0: i32, %arg1: memref<8x8x16xf32, #tpu.memory_space<vmem>>, %arg2: memref<48x128xf32, #tpu.memory_space<vmem>>, %arg3: memref<1x128xf32, #tpu.memory_space<vmem>>, %arg4: memref<64x128xf32, #tpu.memory_space<vmem>>, %arg5: memref<1x128xf32, #tpu.memory_space<vmem>>, %arg6: memref<32x8xf32, #tpu.memory_space<vmem>>, %arg7: memref<1x8xf32, #tpu.memory_space<vmem>>, %arg8: memref<8x8xf32, #tpu.memory_space<vmem>>, %arg9: memref<2x8x32xf32, #tpu.memory_space<vmem>>, %arg10: memref<2x8x32xf32, #tpu.memory_space<vmem>>) attributes {dimension_semantics = [#tpu.dimension_semantics<arbitrary>], iteration_bounds = array<i64: 1>, scalar_prefetch = 0 : i64, scratch_operands = 0 : i64, tpu.core_type = #tpu.core_type<tc>, window_params = [{pipeline_mode = #tpu.pipeline_mode<synchronous>, transform_indices = @transform_0, window_bounds = array<i64: 8, 8, 16>}, {pipeline_mode = #tpu.pipeline_mode<synchronous>, transform_indices = @transform_1, window_bounds = array<i64: 48, 128>}, {pipeline_mode = #tpu.pipeline_mode<synchronous>, transform_indices = @transform_2, window_bounds = array<i64: 1, 128>}, {pipeline_mode = #tpu.pipeline_mode<synchronous>, transform_indices = @transform_3, window_bounds = array<i64: 64, 128>}, {pipeline_mode = #tpu.pipeline_mode<synchronous>, transform_indices = @transform_4, window_bounds = array<i64: 1, 128>}, {pipeline_mode = #tpu.pipeline_mode<synchronous>, transform_indices = @transform_5, window_bounds = array<i64: 32, 8>}, {pipeline_mode = #tpu.pipeline_mode<synchronous>, transform_indices = @transform_6, window_bounds = array<i64: 1, 8>}, {pipeline_mode = #tpu.pipeline_mode<synchronous>, transform_indices = @transform_7, window_bounds = array<i64: 8, 8>}, {pipeline_mode = #tpu.pipeline_mode<synchronous>, transform_indices = @transform_8, window_bounds = array<i64: 2, 8, 32>}, {pipeline_mode = #tpu.pipeline_mode<synchronous>, transform_indices = @transform_9, window_bounds = array<i64: 2, 8, 32>}]} {
    %c0 = arith.constant 0 : index
    %c0_0 = arith.constant 0 : index
    %0 = vector.load %arg2[%c0, %c0_0] : memref<48x128xf32, #tpu.memory_space<vmem>>, vector<48x128xf32>
    %c0_1 = arith.constant 0 : index
    %c0_2 = arith.constant 0 : index
    %1 = vector.load %arg3[%c0_1, %c0_2] : memref<1x128xf32, #tpu.memory_space<vmem>>, vector<1x128xf32>
    %c0_3 = arith.constant 0 : index
    %c0_4 = arith.constant 0 : index
    %2 = vector.load %arg4[%c0_3, %c0_4] : memref<64x128xf32, #tpu.memory_space<vmem>>, vector<64x128xf32>
    %c0_5 = arith.constant 0 : index
    %c0_6 = arith.constant 0 : index
    %3 = vector.load %arg5[%c0_5, %c0_6] : memref<1x128xf32, #tpu.memory_space<vmem>>, vector<1x128xf32>
    %4 = tpu.iota {dimensions = array<i32: 1>} : vector<8x128xi32>
    %c96_i32 = arith.constant 96 : i32
    %5 = vector.broadcast %c96_i32 : i32 to vector<8x128xi32>
    %6 = arith.cmpi slt, %4, %5 : vector<8x128xi32>
    %cst = arith.constant 0.000000e+00 : f32
    %7 = vector.broadcast %cst : f32 to vector<8x32xf32>
    %c0_i32 = arith.constant 0 : i32
    %8 = arith.index_cast %c0_i32 : i32 to index
    %c0_7 = arith.constant 0 : index
    %c0_8 = arith.constant 0 : index
    %9 = vector.load %arg1[%8, %c0_7, %c0_8] : memref<8x8x16xf32, #tpu.memory_space<vmem>>, vector<1x8x16xf32>
    %10 = vector.shape_cast %9 : vector<1x8x16xf32> to vector<8x16xf32>
    %11 = tpu.concatenate %10, %7 in 1 : vector<8x16xf32>, vector<8x32xf32> -> vector<8x48xf32>
    %cst_9 = arith.constant dense<0.000000e+00> : vector<8x128xf32>
    %12 = tpu.matmul %11, %0, %cst_9 {dimension_numbers = #tpu.dot_dimension_numbers<[1], [0], [0], [1], [0, 0, 1, 1], [], []>} : vector<8x48xf32>, vector<48x128xf32>, vector<8x128xf32> -> vector<8x128xf32>
    %13 = vector.broadcast %1 : vector<1x128xf32> to vector<8x128xf32>
    %14 = arith.addf %12, %13 : vector<8x128xf32>
    %15 = arith.negf %14 : vector<8x128xf32>
    %16 = math.exp %15 : vector<8x128xf32>
    %cst_10 = arith.constant 1.000000e+00 : f32
    %17 = vector.broadcast %cst_10 : f32 to vector<8x128xf32>
    %18 = arith.addf %17, %16 : vector<8x128xf32>
    %19 = arith.divf %17, %18 : vector<8x128xf32>
    %20 = math.tanh %14 : vector<8x128xf32>
    %21 = arith.select %6, %19, %20 : vector<8x128xi1>, vector<8x128xf32>
    %22 = vector.extract_strided_slice %21 {offsets = [0, 0], sizes = [8, 32], strides = [1, 1]} : vector<8x128xf32> to vector<8x32xf32>
    %23 = vector.extract_strided_slice %21 {offsets = [0, 32], sizes = [8, 32], strides = [1, 1]} : vector<8x128xf32> to vector<8x32xf32>
    %24 = vector.extract_strided_slice %21 {offsets = [0, 64], sizes = [8, 32], strides = [1, 1]} : vector<8x128xf32> to vector<8x32xf32>
    %25 = vector.extract_strided_slice %21 {offsets = [0, 96], sizes = [8, 32], strides = [1, 1]} : vector<8x128xf32> to vector<8x32xf32>
    %26 = arith.mulf %23, %7 : vector<8x32xf32>
    %27 = arith.mulf %22, %25 : vector<8x32xf32>
    %28 = arith.addf %26, %27 : vector<8x32xf32>
    %29 = math.tanh %28 : vector<8x32xf32>
    %30 = arith.mulf %24, %29 : vector<8x32xf32>
    %31 = tpu.concatenate %30, %7 in 1 : vector<8x32xf32>, vector<8x32xf32> -> vector<8x64xf32>
    %cst_11 = arith.constant dense<0.000000e+00> : vector<8x128xf32>
    %32 = tpu.matmul %31, %2, %cst_11 {dimension_numbers = #tpu.dot_dimension_numbers<[1], [0], [0], [1], [0, 0, 1, 1], [], []>} : vector<8x64xf32>, vector<64x128xf32>, vector<8x128xf32> -> vector<8x128xf32>
    %33 = vector.broadcast %3 : vector<1x128xf32> to vector<8x128xf32>
    %34 = arith.addf %32, %33 : vector<8x128xf32>
    %35 = arith.negf %34 : vector<8x128xf32>
    %36 = math.exp %35 : vector<8x128xf32>
    %cst_12 = arith.constant 1.000000e+00 : f32
    %37 = vector.broadcast %cst_12 : f32 to vector<8x128xf32>
    %38 = arith.addf %37, %36 : vector<8x128xf32>
    %39 = arith.divf %37, %38 : vector<8x128xf32>
    %40 = math.tanh %34 : vector<8x128xf32>
    %41 = arith.select %6, %39, %40 : vector<8x128xi1>, vector<8x128xf32>
    %42 = vector.extract_strided_slice %41 {offsets = [0, 0], sizes = [8, 32], strides = [1, 1]} : vector<8x128xf32> to vector<8x32xf32>
    %43 = vector.extract_strided_slice %41 {offsets = [0, 32], sizes = [8, 32], strides = [1, 1]} : vector<8x128xf32> to vector<8x32xf32>
    %44 = vector.extract_strided_slice %41 {offsets = [0, 64], sizes = [8, 32], strides = [1, 1]} : vector<8x128xf32> to vector<8x32xf32>
    %45 = vector.extract_strided_slice %41 {offsets = [0, 96], sizes = [8, 32], strides = [1, 1]} : vector<8x128xf32> to vector<8x32xf32>
    %46 = arith.mulf %43, %7 : vector<8x32xf32>
    %47 = arith.mulf %42, %45 : vector<8x32xf32>
    %48 = arith.addf %46, %47 : vector<8x32xf32>
    %49 = math.tanh %48 : vector<8x32xf32>
    %50 = arith.mulf %44, %49 : vector<8x32xf32>
    %c1_i32 = arith.constant 1 : i32
    %51 = arith.index_cast %c1_i32 : i32 to index
    %c0_13 = arith.constant 0 : index
    %c0_14 = arith.constant 0 : index
    %52 = vector.load %arg1[%51, %c0_13, %c0_14] : memref<8x8x16xf32, #tpu.memory_space<vmem>>, vector<1x8x16xf32>
    %53 = vector.shape_cast %52 : vector<1x8x16xf32> to vector<8x16xf32>
    %54 = tpu.concatenate %53, %30 in 1 : vector<8x16xf32>, vector<8x32xf32> -> vector<8x48xf32>
    %cst_15 = arith.constant dense<0.000000e+00> : vector<8x128xf32>
    %55 = tpu.matmul %54, %0, %cst_15 {dimension_numbers = #tpu.dot_dimension_numbers<[1], [0], [0], [1], [0, 0, 1, 1], [], []>} : vector<8x48xf32>, vector<48x128xf32>, vector<8x128xf32> -> vector<8x128xf32>
    %56 = vector.broadcast %1 : vector<1x128xf32> to vector<8x128xf32>
    %57 = arith.addf %55, %56 : vector<8x128xf32>
    %58 = arith.negf %57 : vector<8x128xf32>
    %59 = math.exp %58 : vector<8x128xf32>
    %cst_16 = arith.constant 1.000000e+00 : f32
    %60 = vector.broadcast %cst_16 : f32 to vector<8x128xf32>
    %61 = arith.addf %60, %59 : vector<8x128xf32>
    %62 = arith.divf %60, %61 : vector<8x128xf32>
    %63 = math.tanh %57 : vector<8x128xf32>
    %64 = arith.select %6, %62, %63 : vector<8x128xi1>, vector<8x128xf32>
    %65 = vector.extract_strided_slice %64 {offsets = [0, 0], sizes = [8, 32], strides = [1, 1]} : vector<8x128xf32> to vector<8x32xf32>
    %66 = vector.extract_strided_slice %64 {offsets = [0, 32], sizes = [8, 32], strides = [1, 1]} : vector<8x128xf32> to vector<8x32xf32>
    %67 = vector.extract_strided_slice %64 {offsets = [0, 64], sizes = [8, 32], strides = [1, 1]} : vector<8x128xf32> to vector<8x32xf32>
    %68 = vector.extract_strided_slice %64 {offsets = [0, 96], sizes = [8, 32], strides = [1, 1]} : vector<8x128xf32> to vector<8x32xf32>
    %69 = arith.mulf %66, %28 : vector<8x32xf32>
    %70 = arith.mulf %65, %68 : vector<8x32xf32>
    %71 = arith.addf %69, %70 : vector<8x32xf32>
    %72 = math.tanh %71 : vector<8x32xf32>
    %73 = arith.mulf %67, %72 : vector<8x32xf32>
    %74 = tpu.concatenate %73, %50 in 1 : vector<8x32xf32>, vector<8x32xf32> -> vector<8x64xf32>
    %cst_17 = arith.constant dense<0.000000e+00> : vector<8x128xf32>
    %75 = tpu.matmul %74, %2, %cst_17 {dimension_numbers = #tpu.dot_dimension_numbers<[1], [0], [0], [1], [0, 0, 1, 1], [], []>} : vector<8x64xf32>, vector<64x128xf32>, vector<8x128xf32> -> vector<8x128xf32>
    %76 = vector.broadcast %3 : vector<1x128xf32> to vector<8x128xf32>
    %77 = arith.addf %75, %76 : vector<8x128xf32>
    %78 = arith.negf %77 : vector<8x128xf32>
    %79 = math.exp %78 : vector<8x128xf32>
    %cst_18 = arith.constant 1.000000e+00 : f32
    %80 = vector.broadcast %cst_18 : f32 to vector<8x128xf32>
    %81 = arith.addf %80, %79 : vector<8x128xf32>
    %82 = arith.divf %80, %81 : vector<8x128xf32>
    %83 = math.tanh %77 : vector<8x128xf32>
    %84 = arith.select %6, %82, %83 : vector<8x128xi1>, vector<8x128xf32>
    %85 = vector.extract_strided_slice %84 {offsets = [0, 0], sizes = [8, 32], strides = [1, 1]} : vector<8x128xf32> to vector<8x32xf32>
    %86 = vector.extract_strided_slice %84 {offsets = [0, 32], sizes = [8, 32], strides = [1, 1]} : vector<8x128xf32> to vector<8x32xf32>
    %87 = vector.extract_strided_slice %84 {offsets = [0, 64], sizes = [8, 32], strides = [1, 1]} : vector<8x128xf32> to vector<8x32xf32>
    %88 = vector.extract_strided_slice %84 {offsets = [0, 96], sizes = [8, 32], strides = [1, 1]} : vector<8x128xf32> to vector<8x32xf32>
    %89 = arith.mulf %86, %48 : vector<8x32xf32>
    %90 = arith.mulf %85, %88 : vector<8x32xf32>
    %91 = arith.addf %89, %90 : vector<8x32xf32>
    %92 = math.tanh %91 : vector<8x32xf32>
    %93 = arith.mulf %87, %92 : vector<8x32xf32>
    %c2_i32 = arith.constant 2 : i32
    %94 = arith.index_cast %c2_i32 : i32 to index
    %c0_19 = arith.constant 0 : index
    %c0_20 = arith.constant 0 : index
    %95 = vector.load %arg1[%94, %c0_19, %c0_20] : memref<8x8x16xf32, #tpu.memory_space<vmem>>, vector<1x8x16xf32>
    %96 = vector.shape_cast %95 : vector<1x8x16xf32> to vector<8x16xf32>
    %97 = tpu.concatenate %96, %73 in 1 : vector<8x16xf32>, vector<8x32xf32> -> vector<8x48xf32>
    %cst_21 = arith.constant dense<0.000000e+00> : vector<8x128xf32>
    %98 = tpu.matmul %97, %0, %cst_21 {dimension_numbers = #tpu.dot_dimension_numbers<[1], [0], [0], [1], [0, 0, 1, 1], [], []>} : vector<8x48xf32>, vector<48x128xf32>, vector<8x128xf32> -> vector<8x128xf32>
    %99 = vector.broadcast %1 : vector<1x128xf32> to vector<8x128xf32>
    %100 = arith.addf %98, %99 : vector<8x128xf32>
    %101 = arith.negf %100 : vector<8x128xf32>
    %102 = math.exp %101 : vector<8x128xf32>
    %cst_22 = arith.constant 1.000000e+00 : f32
    %103 = vector.broadcast %cst_22 : f32 to vector<8x128xf32>
    %104 = arith.addf %103, %102 : vector<8x128xf32>
    %105 = arith.divf %103, %104 : vector<8x128xf32>
    %106 = math.tanh %100 : vector<8x128xf32>
    %107 = arith.select %6, %105, %106 : vector<8x128xi1>, vector<8x128xf32>
    %108 = vector.extract_strided_slice %107 {offsets = [0, 0], sizes = [8, 32], strides = [1, 1]} : vector<8x128xf32> to vector<8x32xf32>
    %109 = vector.extract_strided_slice %107 {offsets = [0, 32], sizes = [8, 32], strides = [1, 1]} : vector<8x128xf32> to vector<8x32xf32>
    %110 = vector.extract_strided_slice %107 {offsets = [0, 64], sizes = [8, 32], strides = [1, 1]} : vector<8x128xf32> to vector<8x32xf32>
    %111 = vector.extract_strided_slice %107 {offsets = [0, 96], sizes = [8, 32], strides = [1, 1]} : vector<8x128xf32> to vector<8x32xf32>
    %112 = arith.mulf %109, %71 : vector<8x32xf32>
    %113 = arith.mulf %108, %111 : vector<8x32xf32>
    %114 = arith.addf %112, %113 : vector<8x32xf32>
    %115 = math.tanh %114 : vector<8x32xf32>
    %116 = arith.mulf %110, %115 : vector<8x32xf32>
    %117 = tpu.concatenate %116, %93 in 1 : vector<8x32xf32>, vector<8x32xf32> -> vector<8x64xf32>
    %cst_23 = arith.constant dense<0.000000e+00> : vector<8x128xf32>
    %118 = tpu.matmul %117, %2, %cst_23 {dimension_numbers = #tpu.dot_dimension_numbers<[1], [0], [0], [1], [0, 0, 1, 1], [], []>} : vector<8x64xf32>, vector<64x128xf32>, vector<8x128xf32> -> vector<8x128xf32>
    %119 = vector.broadcast %3 : vector<1x128xf32> to vector<8x128xf32>
    %120 = arith.addf %118, %119 : vector<8x128xf32>
    %121 = arith.negf %120 : vector<8x128xf32>
    %122 = math.exp %121 : vector<8x128xf32>
    %cst_24 = arith.constant 1.000000e+00 : f32
    %123 = vector.broadcast %cst_24 : f32 to vector<8x128xf32>
    %124 = arith.addf %123, %122 : vector<8x128xf32>
    %125 = arith.divf %123, %124 : vector<8x128xf32>
    %126 = math.tanh %120 : vector<8x128xf32>
    %127 = arith.select %6, %125, %126 : vector<8x128xi1>, vector<8x128xf32>
    %128 = vector.extract_strided_slice %127 {offsets = [0, 0], sizes = [8, 32], strides = [1, 1]} : vector<8x128xf32> to vector<8x32xf32>
    %129 = vector.extract_strided_slice %127 {offsets = [0, 32], sizes = [8, 32], strides = [1, 1]} : vector<8x128xf32> to vector<8x32xf32>
    %130 = vector.extract_strided_slice %127 {offsets = [0, 64], sizes = [8, 32], strides = [1, 1]} : vector<8x128xf32> to vector<8x32xf32>
    %131 = vector.extract_strided_slice %127 {offsets = [0, 96], sizes = [8, 32], strides = [1, 1]} : vector<8x128xf32> to vector<8x32xf32>
    %132 = arith.mulf %129, %91 : vector<8x32xf32>
    %133 = arith.mulf %128, %131 : vector<8x32xf32>
    %134 = arith.addf %132, %133 : vector<8x32xf32>
    %135 = math.tanh %134 : vector<8x32xf32>
    %136 = arith.mulf %130, %135 : vector<8x32xf32>
    %c3_i32 = arith.constant 3 : i32
    %137 = arith.index_cast %c3_i32 : i32 to index
    %c0_25 = arith.constant 0 : index
    %c0_26 = arith.constant 0 : index
    %138 = vector.load %arg1[%137, %c0_25, %c0_26] : memref<8x8x16xf32, #tpu.memory_space<vmem>>, vector<1x8x16xf32>
    %139 = vector.shape_cast %138 : vector<1x8x16xf32> to vector<8x16xf32>
    %140 = tpu.concatenate %139, %116 in 1 : vector<8x16xf32>, vector<8x32xf32> -> vector<8x48xf32>
    %cst_27 = arith.constant dense<0.000000e+00> : vector<8x128xf32>
    %141 = tpu.matmul %140, %0, %cst_27 {dimension_numbers = #tpu.dot_dimension_numbers<[1], [0], [0], [1], [0, 0, 1, 1], [], []>} : vector<8x48xf32>, vector<48x128xf32>, vector<8x128xf32> -> vector<8x128xf32>
    %142 = vector.broadcast %1 : vector<1x128xf32> to vector<8x128xf32>
    %143 = arith.addf %141, %142 : vector<8x128xf32>
    %144 = arith.negf %143 : vector<8x128xf32>
    %145 = math.exp %144 : vector<8x128xf32>
    %cst_28 = arith.constant 1.000000e+00 : f32
    %146 = vector.broadcast %cst_28 : f32 to vector<8x128xf32>
    %147 = arith.addf %146, %145 : vector<8x128xf32>
    %148 = arith.divf %146, %147 : vector<8x128xf32>
    %149 = math.tanh %143 : vector<8x128xf32>
    %150 = arith.select %6, %148, %149 : vector<8x128xi1>, vector<8x128xf32>
    %151 = vector.extract_strided_slice %150 {offsets = [0, 0], sizes = [8, 32], strides = [1, 1]} : vector<8x128xf32> to vector<8x32xf32>
    %152 = vector.extract_strided_slice %150 {offsets = [0, 32], sizes = [8, 32], strides = [1, 1]} : vector<8x128xf32> to vector<8x32xf32>
    %153 = vector.extract_strided_slice %150 {offsets = [0, 64], sizes = [8, 32], strides = [1, 1]} : vector<8x128xf32> to vector<8x32xf32>
    %154 = vector.extract_strided_slice %150 {offsets = [0, 96], sizes = [8, 32], strides = [1, 1]} : vector<8x128xf32> to vector<8x32xf32>
    %155 = arith.mulf %152, %114 : vector<8x32xf32>
    %156 = arith.mulf %151, %154 : vector<8x32xf32>
    %157 = arith.addf %155, %156 : vector<8x32xf32>
    %158 = math.tanh %157 : vector<8x32xf32>
    %159 = arith.mulf %153, %158 : vector<8x32xf32>
    %160 = tpu.concatenate %159, %136 in 1 : vector<8x32xf32>, vector<8x32xf32> -> vector<8x64xf32>
    %cst_29 = arith.constant dense<0.000000e+00> : vector<8x128xf32>
    %161 = tpu.matmul %160, %2, %cst_29 {dimension_numbers = #tpu.dot_dimension_numbers<[1], [0], [0], [1], [0, 0, 1, 1], [], []>} : vector<8x64xf32>, vector<64x128xf32>, vector<8x128xf32> -> vector<8x128xf32>
    %162 = vector.broadcast %3 : vector<1x128xf32> to vector<8x128xf32>
    %163 = arith.addf %161, %162 : vector<8x128xf32>
    %164 = arith.negf %163 : vector<8x128xf32>
    %165 = math.exp %164 : vector<8x128xf32>
    %cst_30 = arith.constant 1.000000e+00 : f32
    %166 = vector.broadcast %cst_30 : f32 to vector<8x128xf32>
    %167 = arith.addf %166, %165 : vector<8x128xf32>
    %168 = arith.divf %166, %167 : vector<8x128xf32>
    %169 = math.tanh %163 : vector<8x128xf32>
    %170 = arith.select %6, %168, %169 : vector<8x128xi1>, vector<8x128xf32>
    %171 = vector.extract_strided_slice %170 {offsets = [0, 0], sizes = [8, 32], strides = [1, 1]} : vector<8x128xf32> to vector<8x32xf32>
    %172 = vector.extract_strided_slice %170 {offsets = [0, 32], sizes = [8, 32], strides = [1, 1]} : vector<8x128xf32> to vector<8x32xf32>
    %173 = vector.extract_strided_slice %170 {offsets = [0, 64], sizes = [8, 32], strides = [1, 1]} : vector<8x128xf32> to vector<8x32xf32>
    %174 = vector.extract_strided_slice %170 {offsets = [0, 96], sizes = [8, 32], strides = [1, 1]} : vector<8x128xf32> to vector<8x32xf32>
    %175 = arith.mulf %172, %134 : vector<8x32xf32>
    %176 = arith.mulf %171, %174 : vector<8x32xf32>
    %177 = arith.addf %175, %176 : vector<8x32xf32>
    %178 = math.tanh %177 : vector<8x32xf32>
    %179 = arith.mulf %173, %178 : vector<8x32xf32>
    %c4_i32 = arith.constant 4 : i32
    %180 = arith.index_cast %c4_i32 : i32 to index
    %c0_31 = arith.constant 0 : index
    %c0_32 = arith.constant 0 : index
    %181 = vector.load %arg1[%180, %c0_31, %c0_32] : memref<8x8x16xf32, #tpu.memory_space<vmem>>, vector<1x8x16xf32>
    %182 = vector.shape_cast %181 : vector<1x8x16xf32> to vector<8x16xf32>
    %183 = tpu.concatenate %182, %159 in 1 : vector<8x16xf32>, vector<8x32xf32> -> vector<8x48xf32>
    %cst_33 = arith.constant dense<0.000000e+00> : vector<8x128xf32>
    %184 = tpu.matmul %183, %0, %cst_33 {dimension_numbers = #tpu.dot_dimension_numbers<[1], [0], [0], [1], [0, 0, 1, 1], [], []>} : vector<8x48xf32>, vector<48x128xf32>, vector<8x128xf32> -> vector<8x128xf32>
    %185 = vector.broadcast %1 : vector<1x128xf32> to vector<8x128xf32>
    %186 = arith.addf %184, %185 : vector<8x128xf32>
    %187 = arith.negf %186 : vector<8x128xf32>
    %188 = math.exp %187 : vector<8x128xf32>
    %cst_34 = arith.constant 1.000000e+00 : f32
    %189 = vector.broadcast %cst_34 : f32 to vector<8x128xf32>
    %190 = arith.addf %189, %188 : vector<8x128xf32>
    %191 = arith.divf %189, %190 : vector<8x128xf32>
    %192 = math.tanh %186 : vector<8x128xf32>
    %193 = arith.select %6, %191, %192 : vector<8x128xi1>, vector<8x128xf32>
    %194 = vector.extract_strided_slice %193 {offsets = [0, 0], sizes = [8, 32], strides = [1, 1]} : vector<8x128xf32> to vector<8x32xf32>
    %195 = vector.extract_strided_slice %193 {offsets = [0, 32], sizes = [8, 32], strides = [1, 1]} : vector<8x128xf32> to vector<8x32xf32>
    %196 = vector.extract_strided_slice %193 {offsets = [0, 64], sizes = [8, 32], strides = [1, 1]} : vector<8x128xf32> to vector<8x32xf32>
    %197 = vector.extract_strided_slice %193 {offsets = [0, 96], sizes = [8, 32], strides = [1, 1]} : vector<8x128xf32> to vector<8x32xf32>
    %198 = arith.mulf %195, %157 : vector<8x32xf32>
    %199 = arith.mulf %194, %197 : vector<8x32xf32>
    %200 = arith.addf %198, %199 : vector<8x32xf32>
    %201 = math.tanh %200 : vector<8x32xf32>
    %202 = arith.mulf %196, %201 : vector<8x32xf32>
    %203 = tpu.concatenate %202, %179 in 1 : vector<8x32xf32>, vector<8x32xf32> -> vector<8x64xf32>
    %cst_35 = arith.constant dense<0.000000e+00> : vector<8x128xf32>
    %204 = tpu.matmul %203, %2, %cst_35 {dimension_numbers = #tpu.dot_dimension_numbers<[1], [0], [0], [1], [0, 0, 1, 1], [], []>} : vector<8x64xf32>, vector<64x128xf32>, vector<8x128xf32> -> vector<8x128xf32>
    %205 = vector.broadcast %3 : vector<1x128xf32> to vector<8x128xf32>
    %206 = arith.addf %204, %205 : vector<8x128xf32>
    %207 = arith.negf %206 : vector<8x128xf32>
    %208 = math.exp %207 : vector<8x128xf32>
    %cst_36 = arith.constant 1.000000e+00 : f32
    %209 = vector.broadcast %cst_36 : f32 to vector<8x128xf32>
    %210 = arith.addf %209, %208 : vector<8x128xf32>
    %211 = arith.divf %209, %210 : vector<8x128xf32>
    %212 = math.tanh %206 : vector<8x128xf32>
    %213 = arith.select %6, %211, %212 : vector<8x128xi1>, vector<8x128xf32>
    %214 = vector.extract_strided_slice %213 {offsets = [0, 0], sizes = [8, 32], strides = [1, 1]} : vector<8x128xf32> to vector<8x32xf32>
    %215 = vector.extract_strided_slice %213 {offsets = [0, 32], sizes = [8, 32], strides = [1, 1]} : vector<8x128xf32> to vector<8x32xf32>
    %216 = vector.extract_strided_slice %213 {offsets = [0, 64], sizes = [8, 32], strides = [1, 1]} : vector<8x128xf32> to vector<8x32xf32>
    %217 = vector.extract_strided_slice %213 {offsets = [0, 96], sizes = [8, 32], strides = [1, 1]} : vector<8x128xf32> to vector<8x32xf32>
    %218 = arith.mulf %215, %177 : vector<8x32xf32>
    %219 = arith.mulf %214, %217 : vector<8x32xf32>
    %220 = arith.addf %218, %219 : vector<8x32xf32>
    %221 = math.tanh %220 : vector<8x32xf32>
    %222 = arith.mulf %216, %221 : vector<8x32xf32>
    %c5_i32 = arith.constant 5 : i32
    %223 = arith.index_cast %c5_i32 : i32 to index
    %c0_37 = arith.constant 0 : index
    %c0_38 = arith.constant 0 : index
    %224 = vector.load %arg1[%223, %c0_37, %c0_38] : memref<8x8x16xf32, #tpu.memory_space<vmem>>, vector<1x8x16xf32>
    %225 = vector.shape_cast %224 : vector<1x8x16xf32> to vector<8x16xf32>
    %226 = tpu.concatenate %225, %202 in 1 : vector<8x16xf32>, vector<8x32xf32> -> vector<8x48xf32>
    %cst_39 = arith.constant dense<0.000000e+00> : vector<8x128xf32>
    %227 = tpu.matmul %226, %0, %cst_39 {dimension_numbers = #tpu.dot_dimension_numbers<[1], [0], [0], [1], [0, 0, 1, 1], [], []>} : vector<8x48xf32>, vector<48x128xf32>, vector<8x128xf32> -> vector<8x128xf32>
    %228 = vector.broadcast %1 : vector<1x128xf32> to vector<8x128xf32>
    %229 = arith.addf %227, %228 : vector<8x128xf32>
    %230 = arith.negf %229 : vector<8x128xf32>
    %231 = math.exp %230 : vector<8x128xf32>
    %cst_40 = arith.constant 1.000000e+00 : f32
    %232 = vector.broadcast %cst_40 : f32 to vector<8x128xf32>
    %233 = arith.addf %232, %231 : vector<8x128xf32>
    %234 = arith.divf %232, %233 : vector<8x128xf32>
    %235 = math.tanh %229 : vector<8x128xf32>
    %236 = arith.select %6, %234, %235 : vector<8x128xi1>, vector<8x128xf32>
    %237 = vector.extract_strided_slice %236 {offsets = [0, 0], sizes = [8, 32], strides = [1, 1]} : vector<8x128xf32> to vector<8x32xf32>
    %238 = vector.extract_strided_slice %236 {offsets = [0, 32], sizes = [8, 32], strides = [1, 1]} : vector<8x128xf32> to vector<8x32xf32>
    %239 = vector.extract_strided_slice %236 {offsets = [0, 64], sizes = [8, 32], strides = [1, 1]} : vector<8x128xf32> to vector<8x32xf32>
    %240 = vector.extract_strided_slice %236 {offsets = [0, 96], sizes = [8, 32], strides = [1, 1]} : vector<8x128xf32> to vector<8x32xf32>
    %241 = arith.mulf %238, %200 : vector<8x32xf32>
    %242 = arith.mulf %237, %240 : vector<8x32xf32>
    %243 = arith.addf %241, %242 : vector<8x32xf32>
    %244 = math.tanh %243 : vector<8x32xf32>
    %245 = arith.mulf %239, %244 : vector<8x32xf32>
    %246 = tpu.concatenate %245, %222 in 1 : vector<8x32xf32>, vector<8x32xf32> -> vector<8x64xf32>
    %cst_41 = arith.constant dense<0.000000e+00> : vector<8x128xf32>
    %247 = tpu.matmul %246, %2, %cst_41 {dimension_numbers = #tpu.dot_dimension_numbers<[1], [0], [0], [1], [0, 0, 1, 1], [], []>} : vector<8x64xf32>, vector<64x128xf32>, vector<8x128xf32> -> vector<8x128xf32>
    %248 = vector.broadcast %3 : vector<1x128xf32> to vector<8x128xf32>
    %249 = arith.addf %247, %248 : vector<8x128xf32>
    %250 = arith.negf %249 : vector<8x128xf32>
    %251 = math.exp %250 : vector<8x128xf32>
    %cst_42 = arith.constant 1.000000e+00 : f32
    %252 = vector.broadcast %cst_42 : f32 to vector<8x128xf32>
    %253 = arith.addf %252, %251 : vector<8x128xf32>
    %254 = arith.divf %252, %253 : vector<8x128xf32>
    %255 = math.tanh %249 : vector<8x128xf32>
    %256 = arith.select %6, %254, %255 : vector<8x128xi1>, vector<8x128xf32>
    %257 = vector.extract_strided_slice %256 {offsets = [0, 0], sizes = [8, 32], strides = [1, 1]} : vector<8x128xf32> to vector<8x32xf32>
    %258 = vector.extract_strided_slice %256 {offsets = [0, 32], sizes = [8, 32], strides = [1, 1]} : vector<8x128xf32> to vector<8x32xf32>
    %259 = vector.extract_strided_slice %256 {offsets = [0, 64], sizes = [8, 32], strides = [1, 1]} : vector<8x128xf32> to vector<8x32xf32>
    %260 = vector.extract_strided_slice %256 {offsets = [0, 96], sizes = [8, 32], strides = [1, 1]} : vector<8x128xf32> to vector<8x32xf32>
    %261 = arith.mulf %258, %220 : vector<8x32xf32>
    %262 = arith.mulf %257, %260 : vector<8x32xf32>
    %263 = arith.addf %261, %262 : vector<8x32xf32>
    %264 = math.tanh %263 : vector<8x32xf32>
    %265 = arith.mulf %259, %264 : vector<8x32xf32>
    %c6_i32 = arith.constant 6 : i32
    %266 = arith.index_cast %c6_i32 : i32 to index
    %c0_43 = arith.constant 0 : index
    %c0_44 = arith.constant 0 : index
    %267 = vector.load %arg1[%266, %c0_43, %c0_44] : memref<8x8x16xf32, #tpu.memory_space<vmem>>, vector<1x8x16xf32>
    %268 = vector.shape_cast %267 : vector<1x8x16xf32> to vector<8x16xf32>
    %269 = tpu.concatenate %268, %245 in 1 : vector<8x16xf32>, vector<8x32xf32> -> vector<8x48xf32>
    %cst_45 = arith.constant dense<0.000000e+00> : vector<8x128xf32>
    %270 = tpu.matmul %269, %0, %cst_45 {dimension_numbers = #tpu.dot_dimension_numbers<[1], [0], [0], [1], [0, 0, 1, 1], [], []>} : vector<8x48xf32>, vector<48x128xf32>, vector<8x128xf32> -> vector<8x128xf32>
    %271 = vector.broadcast %1 : vector<1x128xf32> to vector<8x128xf32>
    %272 = arith.addf %270, %271 : vector<8x128xf32>
    %273 = arith.negf %272 : vector<8x128xf32>
    %274 = math.exp %273 : vector<8x128xf32>
    %cst_46 = arith.constant 1.000000e+00 : f32
    %275 = vector.broadcast %cst_46 : f32 to vector<8x128xf32>
    %276 = arith.addf %275, %274 : vector<8x128xf32>
    %277 = arith.divf %275, %276 : vector<8x128xf32>
    %278 = math.tanh %272 : vector<8x128xf32>
    %279 = arith.select %6, %277, %278 : vector<8x128xi1>, vector<8x128xf32>
    %280 = vector.extract_strided_slice %279 {offsets = [0, 0], sizes = [8, 32], strides = [1, 1]} : vector<8x128xf32> to vector<8x32xf32>
    %281 = vector.extract_strided_slice %279 {offsets = [0, 32], sizes = [8, 32], strides = [1, 1]} : vector<8x128xf32> to vector<8x32xf32>
    %282 = vector.extract_strided_slice %279 {offsets = [0, 64], sizes = [8, 32], strides = [1, 1]} : vector<8x128xf32> to vector<8x32xf32>
    %283 = vector.extract_strided_slice %279 {offsets = [0, 96], sizes = [8, 32], strides = [1, 1]} : vector<8x128xf32> to vector<8x32xf32>
    %284 = arith.mulf %281, %243 : vector<8x32xf32>
    %285 = arith.mulf %280, %283 : vector<8x32xf32>
    %286 = arith.addf %284, %285 : vector<8x32xf32>
    %287 = math.tanh %286 : vector<8x32xf32>
    %288 = arith.mulf %282, %287 : vector<8x32xf32>
    %289 = tpu.concatenate %288, %265 in 1 : vector<8x32xf32>, vector<8x32xf32> -> vector<8x64xf32>
    %cst_47 = arith.constant dense<0.000000e+00> : vector<8x128xf32>
    %290 = tpu.matmul %289, %2, %cst_47 {dimension_numbers = #tpu.dot_dimension_numbers<[1], [0], [0], [1], [0, 0, 1, 1], [], []>} : vector<8x64xf32>, vector<64x128xf32>, vector<8x128xf32> -> vector<8x128xf32>
    %291 = vector.broadcast %3 : vector<1x128xf32> to vector<8x128xf32>
    %292 = arith.addf %290, %291 : vector<8x128xf32>
    %293 = arith.negf %292 : vector<8x128xf32>
    %294 = math.exp %293 : vector<8x128xf32>
    %cst_48 = arith.constant 1.000000e+00 : f32
    %295 = vector.broadcast %cst_48 : f32 to vector<8x128xf32>
    %296 = arith.addf %295, %294 : vector<8x128xf32>
    %297 = arith.divf %295, %296 : vector<8x128xf32>
    %298 = math.tanh %292 : vector<8x128xf32>
    %299 = arith.select %6, %297, %298 : vector<8x128xi1>, vector<8x128xf32>
    %300 = vector.extract_strided_slice %299 {offsets = [0, 0], sizes = [8, 32], strides = [1, 1]} : vector<8x128xf32> to vector<8x32xf32>
    %301 = vector.extract_strided_slice %299 {offsets = [0, 32], sizes = [8, 32], strides = [1, 1]} : vector<8x128xf32> to vector<8x32xf32>
    %302 = vector.extract_strided_slice %299 {offsets = [0, 64], sizes = [8, 32], strides = [1, 1]} : vector<8x128xf32> to vector<8x32xf32>
    %303 = vector.extract_strided_slice %299 {offsets = [0, 96], sizes = [8, 32], strides = [1, 1]} : vector<8x128xf32> to vector<8x32xf32>
    %304 = arith.mulf %301, %263 : vector<8x32xf32>
    %305 = arith.mulf %300, %303 : vector<8x32xf32>
    %306 = arith.addf %304, %305 : vector<8x32xf32>
    %307 = math.tanh %306 : vector<8x32xf32>
    %308 = arith.mulf %302, %307 : vector<8x32xf32>
    %c7_i32 = arith.constant 7 : i32
    %309 = arith.index_cast %c7_i32 : i32 to index
    %c0_49 = arith.constant 0 : index
    %c0_50 = arith.constant 0 : index
    %310 = vector.load %arg1[%309, %c0_49, %c0_50] : memref<8x8x16xf32, #tpu.memory_space<vmem>>, vector<1x8x16xf32>
    %311 = vector.shape_cast %310 : vector<1x8x16xf32> to vector<8x16xf32>
    %312 = tpu.concatenate %311, %288 in 1 : vector<8x16xf32>, vector<8x32xf32> -> vector<8x48xf32>
    %cst_51 = arith.constant dense<0.000000e+00> : vector<8x128xf32>
    %313 = tpu.matmul %312, %0, %cst_51 {dimension_numbers = #tpu.dot_dimension_numbers<[1], [0], [0], [1], [0, 0, 1, 1], [], []>} : vector<8x48xf32>, vector<48x128xf32>, vector<8x128xf32> -> vector<8x128xf32>
    %314 = vector.broadcast %1 : vector<1x128xf32> to vector<8x128xf32>
    %315 = arith.addf %313, %314 : vector<8x128xf32>
    %316 = arith.negf %315 : vector<8x128xf32>
    %317 = math.exp %316 : vector<8x128xf32>
    %cst_52 = arith.constant 1.000000e+00 : f32
    %318 = vector.broadcast %cst_52 : f32 to vector<8x128xf32>
    %319 = arith.addf %318, %317 : vector<8x128xf32>
    %320 = arith.divf %318, %319 : vector<8x128xf32>
    %321 = math.tanh %315 : vector<8x128xf32>
    %322 = arith.select %6, %320, %321 : vector<8x128xi1>, vector<8x128xf32>
    %323 = vector.extract_strided_slice %322 {offsets = [0, 0], sizes = [8, 32], strides = [1, 1]} : vector<8x128xf32> to vector<8x32xf32>
    %324 = vector.extract_strided_slice %322 {offsets = [0, 32], sizes = [8, 32], strides = [1, 1]} : vector<8x128xf32> to vector<8x32xf32>
    %325 = vector.extract_strided_slice %322 {offsets = [0, 64], sizes = [8, 32], strides = [1, 1]} : vector<8x128xf32> to vector<8x32xf32>
    %326 = vector.extract_strided_slice %322 {offsets = [0, 96], sizes = [8, 32], strides = [1, 1]} : vector<8x128xf32> to vector<8x32xf32>
    %327 = arith.mulf %324, %286 : vector<8x32xf32>
    %328 = arith.mulf %323, %326 : vector<8x32xf32>
    %329 = arith.addf %327, %328 : vector<8x32xf32>
    %330 = math.tanh %329 : vector<8x32xf32>
    %331 = arith.mulf %325, %330 : vector<8x32xf32>
    %332 = tpu.concatenate %331, %308 in 1 : vector<8x32xf32>, vector<8x32xf32> -> vector<8x64xf32>
    %cst_53 = arith.constant dense<0.000000e+00> : vector<8x128xf32>
    %333 = tpu.matmul %332, %2, %cst_53 {dimension_numbers = #tpu.dot_dimension_numbers<[1], [0], [0], [1], [0, 0, 1, 1], [], []>} : vector<8x64xf32>, vector<64x128xf32>, vector<8x128xf32> -> vector<8x128xf32>
    %334 = vector.broadcast %3 : vector<1x128xf32> to vector<8x128xf32>
    %335 = arith.addf %333, %334 : vector<8x128xf32>
    %336 = arith.negf %335 : vector<8x128xf32>
    %337 = math.exp %336 : vector<8x128xf32>
    %cst_54 = arith.constant 1.000000e+00 : f32
    %338 = vector.broadcast %cst_54 : f32 to vector<8x128xf32>
    %339 = arith.addf %338, %337 : vector<8x128xf32>
    %340 = arith.divf %338, %339 : vector<8x128xf32>
    %341 = math.tanh %335 : vector<8x128xf32>
    %342 = arith.select %6, %340, %341 : vector<8x128xi1>, vector<8x128xf32>
    %343 = vector.extract_strided_slice %342 {offsets = [0, 0], sizes = [8, 32], strides = [1, 1]} : vector<8x128xf32> to vector<8x32xf32>
    %344 = vector.extract_strided_slice %342 {offsets = [0, 32], sizes = [8, 32], strides = [1, 1]} : vector<8x128xf32> to vector<8x32xf32>
    %345 = vector.extract_strided_slice %342 {offsets = [0, 64], sizes = [8, 32], strides = [1, 1]} : vector<8x128xf32> to vector<8x32xf32>
    %346 = vector.extract_strided_slice %342 {offsets = [0, 96], sizes = [8, 32], strides = [1, 1]} : vector<8x128xf32> to vector<8x32xf32>
    %347 = arith.mulf %344, %306 : vector<8x32xf32>
    %348 = arith.mulf %343, %346 : vector<8x32xf32>
    %349 = arith.addf %347, %348 : vector<8x32xf32>
    %350 = math.tanh %349 : vector<8x32xf32>
    %351 = arith.mulf %345, %350 : vector<8x32xf32>
    %c8_i32 = arith.constant 8 : i32
    %c0_55 = arith.constant 0 : index
    %c0_56 = arith.constant 0 : index
    %352 = vector.load %arg6[%c0_55, %c0_56] : memref<32x8xf32, #tpu.memory_space<vmem>>, vector<32x8xf32>
    %cst_57 = arith.constant dense<0.000000e+00> : vector<8x8xf32>
    %353 = tpu.matmul %351, %352, %cst_57 {dimension_numbers = #tpu.dot_dimension_numbers<[1], [0], [0], [1], [0, 0, 1, 1], [], []>} : vector<8x32xf32>, vector<32x8xf32>, vector<8x8xf32> -> vector<8x8xf32>
    %c0_58 = arith.constant 0 : index
    %c0_59 = arith.constant 0 : index
    %354 = vector.load %arg7[%c0_58, %c0_59] : memref<1x8xf32, #tpu.memory_space<vmem>>, vector<1x8xf32>
    %355 = vector.broadcast %354 : vector<1x8xf32> to vector<8x8xf32>
    %356 = arith.addf %353, %355 : vector<8x8xf32>
    %cst_60 = arith.constant dense<0xFF800000> : vector<8xf32>
    %357 = vector.multi_reduction <maximumf>, %356, %cst_60 [1] : vector<8x8xf32> to vector<8xf32>
    %358 = vector.shape_cast %357 : vector<8xf32> to vector<8x1xf32>
    %359 = vector.broadcast %358 : vector<8x1xf32> to vector<8x8xf32>
    %360 = arith.subf %356, %359 : vector<8x8xf32>
    %361 = math.exp %360 : vector<8x8xf32>
    %cst_61 = arith.constant dense<0.000000e+00> : vector<8xf32>
    %362 = vector.multi_reduction <add>, %361, %cst_61 [1] : vector<8x8xf32> to vector<8xf32>
    %363 = vector.shape_cast %362 : vector<8xf32> to vector<8x1xf32>
    %364 = math.log %363 : vector<8x1xf32>
    %365 = vector.broadcast %364 : vector<8x1xf32> to vector<8x8xf32>
    %366 = arith.subf %360, %365 : vector<8x8xf32>
    %c0_62 = arith.constant 0 : index
    %c0_63 = arith.constant 0 : index
    %367 = vector.load %arg8[%c0_62, %c0_63] : memref<8x8xf32, #tpu.memory_space<vmem>>, vector<8x8xf32>
    tpu.vector_store %arg8[%c0_62, %c0_63], %366 {strides = array<i32>} : memref<8x8xf32, #tpu.memory_space<vmem>>, vector<8x8xf32>,
    %c0_64 = arith.constant 0 : index
    %c0_65 = arith.constant 0 : index
    %c0_66 = arith.constant 0 : index
    %368 = vector.load %arg9[%c0_64, %c0_65, %c0_66] : memref<2x8x32xf32, #tpu.memory_space<vmem>>, vector<1x8x32xf32>
    %369 = vector.shape_cast %368 : vector<1x8x32xf32> to vector<8x32xf32>
    %370 = vector.shape_cast %331 : vector<8x32xf32> to vector<1x8x32xf32>
    tpu.vector_store %arg9[%c0_64, %c0_65, %c0_66], %370 {strides = array<i32>} : memref<2x8x32xf32, #tpu.memory_space<vmem>>, vector<1x8x32xf32>,
    %c1 = arith.constant 1 : index
    %c0_67 = arith.constant 0 : index
    %c0_68 = arith.constant 0 : index
    %371 = vector.load %arg9[%c1, %c0_67, %c0_68] : memref<2x8x32xf32, #tpu.memory_space<vmem>>, vector<1x8x32xf32>
    %372 = vector.shape_cast %371 : vector<1x8x32xf32> to vector<8x32xf32>
    %373 = vector.shape_cast %351 : vector<8x32xf32> to vector<1x8x32xf32>
    tpu.vector_store %arg9[%c1, %c0_67, %c0_68], %373 {strides = array<i32>} : memref<2x8x32xf32, #tpu.memory_space<vmem>>, vector<1x8x32xf32>,
    %c0_69 = arith.constant 0 : index
    %c0_70 = arith.constant 0 : index
    %c0_71 = arith.constant 0 : index
    %374 = vector.load %arg10[%c0_69, %c0_70, %c0_71] : memref<2x8x32xf32, #tpu.memory_space<vmem>>, vector<1x8x32xf32>
    %375 = vector.shape_cast %374 : vector<1x8x32xf32> to vector<8x32xf32>
    %376 = vector.shape_cast %329 : vector<8x32xf32> to vector<1x8x32xf32>
    tpu.vector_store %arg10[%c0_69, %c0_70, %c0_71], %376 {strides = array<i32>} : memref<2x8x32xf32, #tpu.memory_space<vmem>>, vector<1x8x32xf32>,
    %c1_72 = arith.constant 1 : index
    %c0_73 = arith.constant 0 : index
    %c0_74 = arith.constant 0 : index
    %377 = vector.load %arg10[%c1_72, %c0_73, %c0_74] : memref<2x8x32xf32, #tpu.memory_space<vmem>>, vector<1x8x32xf32>
    %378 = vector.shape_cast %377 : vector<1x8x32xf32> to vector<8x32xf32>
    %379 = vector.shape_cast %349 : vector<8x32xf32> to vector<1x8x32xf32>
    tpu.vector_store %arg10[%c1_72, %c0_73, %c0_74], %379 {strides = array<i32>} : memref<2x8x32xf32, #tpu.memory_space<vmem>>, vector<1x8x32xf32>,
    return
  }
  func.func @transform_0(%arg0: i32) -> (i32, i32, i32) {
    %c0_i32 = arith.constant 0 : i32
    %c0_i32_0 = arith.constant 0 : i32
    %c0_i32_1 = arith.constant 0 : i32
    %c0_i32_2 = arith.constant 0 : i32
    return %c0_i32, %c0_i32_0, %c0_i32_1 : i32, i32, i32
  }
  func.func @transform_1(%arg0: i32) -> (i32, i32) {
    %c0_i32 = arith.constant 0 : i32
    %c0_i32_0 = arith.constant 0 : i32
    %c0_i32_1 = arith.constant 0 : i32
    return %c0_i32, %c0_i32_0 : i32, i32
  }
  func.func @transform_2(%arg0: i32) -> (i32, i32) {
    %c0_i32 = arith.constant 0 : i32
    %c0_i32_0 = arith.constant 0 : i32
    %c0_i32_1 = arith.constant 0 : i32
    return %c0_i32, %c0_i32_0 : i32, i32
  }
  func.func @transform_3(%arg0: i32) -> (i32, i32) {
    %c0_i32 = arith.constant 0 : i32
    %c0_i32_0 = arith.constant 0 : i32
    %c0_i32_1 = arith.constant 0 : i32
    return %c0_i32, %c0_i32_0 : i32, i32
  }
  func.func @transform_4(%arg0: i32) -> (i32, i32) {
    %c0_i32 = arith.constant 0 : i32
    %c0_i32_0 = arith.constant 0 : i32
    %c0_i32_1 = arith.constant 0 : i32
    return %c0_i32, %c0_i32_0 : i32, i32
  }
  func.func @transform_5(%arg0: i32) -> (i32, i32) {
    %c0_i32 = arith.constant 0 : i32
    %c0_i32_0 = arith.constant 0 : i32
    %c0_i32_1 = arith.constant 0 : i32
    return %c0_i32, %c0_i32_0 : i32, i32
  }
  func.func @transform_6(%arg0: i32) -> (i32, i32) {
    %c0_i32 = arith.constant 0 : i32
    %c0_i32_0 = arith.constant 0 : i32
    %c0_i32_1 = arith.constant 0 : i32
    return %c0_i32, %c0_i32_0 : i32, i32
  }
  func.func @transform_7(%arg0: i32) -> (i32, i32) {
    %c0_i32 = arith.constant 0 : i32
    %c0_i32_0 = arith.constant 0 : i32
    %c0_i32_1 = arith.constant 0 : i32
    return %c0_i32, %c0_i32_0 : i32, i32
  }
  func.func @transform_8(%arg0: i32) -> (i32, i32, i32) {
    %c0_i32 = arith.constant 0 : i32
    %c0_i32_0 = arith.constant 0 : i32
    %c0_i32_1 = arith.constant 0 : i32
    %c0_i32_2 = arith.constant 0 : i32
    return %c0_i32, %c0_i32_0, %c0_i32_1 : i32, i32, i32
  }
  func.func @transform_9(%arg0: i32) -> (i32, i32, i32) {
    %c0_i32 = arith.constant 0 : i32
    %c0_i32_0 = arith.constant 0 : i32
    %c0_i32_1 = arith.constant 0 : i32
    %c0_i32_2 = arith.constant 0 : i32
    return %c0_i32, %c0_i32_0, %c0_i32_1 : i32, i32, i32
  }
}

</mosaic_0001>

<llo_original>
// kernel: lstm_forward.1
$region0: #{lstm_forward.1}
  #allocation0 [shape = 'u32[]', space=smem, size = 0x4, offset = 0x4, fixed_abs, tag = 'smem constant byte address 0x4 - core index']
  #allocation1 [shape = 'u32[144,128]{1,0:T(1,128)}', space=vmem, size = 0x12000, scoped, tag = 'internal scratch']
  %s0 = inlined_call_operand.vmem [shape: f32[8,8,16], index: 0, kind: input, shape index: {}]
  %s1 = inlined_call_operand.vmem [shape: f32[48,128], index: 1, kind: input, shape index: {}]
  %s2 = inlined_call_operand.vmem [shape: f32[1,128], index: 2, kind: input, shape index: {}]
  %s3 = inlined_call_operand.vmem [shape: f32[64,128], index: 3, kind: input, shape index: {}]
  %s4 = inlined_call_operand.vmem [shape: f32[1,128], index: 4, kind: input, shape index: {}]
  %s5 = inlined_call_operand.vmem [shape: f32[32,8], index: 5, kind: input, shape index: {}]
  %s6 = inlined_call_operand.vmem [shape: f32[1,8], index: 6, kind: input, shape index: {}]
  %s7 = inlined_call_operand.vmem [shape: f32[8,8], index: 7, kind: output, shape index: {0}]
  %s8 = inlined_call_operand.vmem [shape: f32[2,8,32], index: 8, kind: output, shape index: {1}]
  %s9 = inlined_call_operand.vmem [shape: f32[2,8,32], index: 9, kind: output, shape index: {2}]
  %10 = xla_tuple %s7, %s8, %s9
  %s11 = sld [smem:[#allocation0]]
  $region54: #{lstm_forward.1} parent=0
    _
  %s13 = ssub.s32 1, %s11
  %s14 = scalar_select 0, %s13, %s11
  // Predicated region
  $region2: #{lstm_forward.1} parent=0 // pred_check
    _
  $region3: #{lstm_forward.1} parent=0 // pred_check_branch
    %16 = sbr.rel (0) target = $region5
  $region4: #{lstm_forward.1} parent=0 // pred_region
    _
  $region5: #{lstm_forward.1} parent=0 // pred_fallthru
    _
  // Predicated region
  $region6: #{lstm_forward.1} parent=0 // pred_check
    _
  $region7: #{lstm_forward.1} parent=0 // pred_check_branch
    %18 = sbr.rel (0) target = $region9
  $region8: #{lstm_forward.1} parent=0 // pred_region
    _
  $region9: #{lstm_forward.1} parent=0 // pred_fallthru
    _
  // Predicated region
  $region10: #{lstm_forward.1} parent=0 // pred_check
    _
  $region11: #{lstm_forward.1} parent=0 // pred_check_branch
    %20 = sbr.rel (0) target = $region13
  $region12: #{lstm_forward.1} parent=0 // pred_region
    _
  $region13: #{lstm_forward.1} parent=0 // pred_fallthru
    _
  // Predicated region
  $region14: #{lstm_forward.1} parent=0 // pred_check
    _
  $region15: #{lstm_forward.1} parent=0 // pred_check_branch
    %22 = sbr.rel (0) target = $region17
  $region16: #{lstm_forward.1} parent=0 // pred_region
    _
  $region17: #{lstm_forward.1} parent=0 // pred_fallthru
    _
  // Predicated region
  $region18: #{lstm_forward.1} parent=0 // pred_check
    _
  $region19: #{lstm_forward.1} parent=0 // pred_check_branch
    %24 = sbr.rel (0) target = $region21
  $region20: #{lstm_forward.1} parent=0 // pred_region
    _
  $region21: #{lstm_forward.1} parent=0 // pred_fallthru
    _
  // Predicated region
  $region22: #{lstm_forward.1} parent=0 // pred_check
    _
  $region23: #{lstm_forward.1} parent=0 // pred_check_branch
    %26 = sbr.rel (0) target = $region25
  $region24: #{lstm_forward.1} parent=0 // pred_region
    _
  $region25: #{lstm_forward.1} parent=0 // pred_fallthru
    _
  // Predicated region
  $region26: #{lstm_forward.1} parent=0 // pred_check
    _
  $region27: #{lstm_forward.1} parent=0 // pred_check_branch
    %28 = sbr.rel (0) target = $region29
  $region28: #{lstm_forward.1} parent=0 // pred_region
    _
  $region29: #{lstm_forward.1} parent=0 // pred_fallthru
    _
  %v29 = vld [vmem:[%s1] sm:$0xff]
  %v30 = vld [vmem:[%s1 + $0x8] sm:$0xff]
  %v31 = vld [vmem:[%s1 + $0x10] sm:$0xff]
  %v32 = vld [vmem:[%s1 + $0x18] sm:$0xff]
  %v33 = vld [vmem:[%s1 + $0x20] sm:$0xff]
  %v34 = vld [vmem:[%s1 + $0x28] sm:$0xff]
  %v35 = vld [vmem:[%s2] sm:$0x1]
  %v36 = vld [vmem:[%s3] sm:$0xff]
  %v37 = vld [vmem:[%s3 + $0x8] sm:$0xff]
  %v38 = vld [vmem:[%s3 + $0x10] sm:$0xff]
  %v39 = vld [vmem:[%s3 + $0x18] sm:$0xff]
  %v40 = vld [vmem:[%s3 + $0x20] sm:$0xff]
  %v41 = vld [vmem:[%s3 + $0x28] sm:$0xff]
  %v42 = vld [vmem:[%s3 + $0x30] sm:$0xff]
  %v43 = vld [vmem:[%s3 + $0x38] sm:$0xff]
  %v44 = vld [vmem:[%s4] sm:$0x1]
  %v45 = vlaneseq
  %v46 = vand.u32 %v45, 127
  %vm47 = vcmp.lt.s32.totalorder %v46, 96
  %v48 = vld [vmem:[%s0] sm:$0xff]
  %vm49 = vcmask 130048
  %v50 = vsel %vm49, %v48, 0.0
  %v52 = vlaneseq
  %v53 = vshrl.u32 %v52, 7
  %v54 = vsub.s32 0, %v53
  %v55 = vrot.slane %v35, %v54
  %vm57 = vcmask 392192
  %v59 = vsel %vm57, %v50, 0
  %61 = vmatprep.subr.mxu0 0.0
  %62 = vmatpush1.msra.mxu0 %v29
  %63 = vmatprep.subr.mxu0 0.0
  %64 = vmatpush1.msra.mxu0 %v30
  %65 = vmatprep.subr.mxu0 0.0
  %66 = vmatpush1.msra.mxu0 %v31
  %67 = vmatprep.subr.mxu0 0.0
  %68 = vmatpush1.msra.mxu0 %v32
  %69 = vmatprep.subr.mxu0 0.0
  %70 = vmatpush1.msra.mxu0 %v33
  %71 = vmatprep.subr.mxu0 0.0
  %72 = vmatpush1.msra.mxu0 %v34
  %73 = vmatprep.subr.mxu0 0.0
  %74 = vmatpush1.msra.mxu0 0.0
  %75 = vmatprep.subr.mxu0 0.0
  %76 = vmatpush1.msra.mxu0 0.0
  %77 = vmatprep.subr.mxu0 0.0
  %78 = vmatpush1.msra.mxu0 0.0
  %79 = vmatprep.subr.mxu0 0.0
  %80 = vmatpush1.msra.mxu0 0.0
  %81 = vmatprep.subr.mxu0 0.0
  %82 = vmatpush1.msra.mxu0 0.0
  %83 = vmatprep.subr.mxu0 0.0
  %84 = vmatpush1.msra.mxu0 0.0
  %85 = vmatprep.subr.mxu0 0.0
  %86 = vmatpush1.msra.mxu0 0.0
  %87 = vmatprep.subr.mxu0 0.0
  %88 = vmatpush1.msra.mxu0 0.0
  %89 = vmatprep.subr.mxu0 0.0
  %90 = vmatpush1.msra.mxu0 0.0
  %91 = vmatprep.subr.mxu0 0.0
  %92 = vmatpush1.msra.mxu0 0.0
  %93 = vmatprep.subr.mxu0 0.0
  %94 = vmatpush1.msra.mxu0 0.0
  %95 = vmatprep.subr.mxu0 0.0
  %96 = vmatpush1.msra.mxu0 0.0
  %97 = vmatprep.subr.mxu0 0.0
  %98 = vmatpush1.msra.mxu0 0.0
  %99 = vmatprep.subr.mxu0 0.0
  %100 = vmatpush1.msra.mxu0 0.0
  %101 = vmatprep.subr.mxu0 0.0
  %102 = vmatpush1.msra.mxu0 0.0
  %103 = vmatprep.subr.mxu0 0.0
  %104 = vmatpush1.msra.mxu0 0.0
  %105 = vmatprep.subr.mxu0 0.0
  %106 = vmatpush1.msra.mxu0 0.0
  %107 = vmatprep.subr.mxu0 0.0
  %108 = vmatpush1.msra.mxu0 0.0
  %109 = vmatprep.subr.mxu0 0.0
  %110 = vmatpush1.msra.mxu0 0.0
  %111 = vmatprep.subr.mxu0 0.0
  %112 = vmatpush1.msra.mxu0 0.0
  %113 = vmatprep.subr.mxu0 0.0
  %114 = vmatpush1.msra.mxu0 0.0
  %115 = vmatprep.subr.mxu0 0.0
  %116 = vmatpush1.msra.mxu0 0.0
  %117 = vmatprep.subr.mxu0 0.0
  %118 = vmatpush1.msra.mxu0 0.0
  %119 = vmatprep.subr.mxu0 0.0
  %120 = vmatpush1.msra.mxu0 0.0
  %121 = vmatprep.subr.mxu0 0.0
  %122 = vmatpush1.msra.mxu0 0.0
  %123 = vmatprep.subr.mxu0 0.0
  %124 = vmatpush1.msra.mxu0 0.0
  %125 = vmatprep.mubr.f32.mxu0 0.0
  %126 = vmatmul.mubr.f32.gmra.mrb[0].mxu0 %v59
  %v127 = vpop.f32.mrb[0].mxu0
  %v128 = vadd.f32 %v55, %v127
  %v129 = vpop.f32.mrb[0].mxu0
  %130 = vdwg.mxu0
  %v131 = vxor.u32 %v128, 2147483648
  %v132 = vmul.f32 %v131, 1.442695
  %v133 = vpow.pop %v132
  %v134 = vadd.f32 %v133, 1.0
  %v135 = vrcp.pop %v134
  %v136 = vmul.f32 1.0, %v135
  %v137 = vtanh.pop %v128
  %v138 = vsel %vm47, %v136, %v137
  %v139 = vmul.f32 %v138, 0.0
  %141 = vrot.lane.b32.xlu0 %v138, 32
  %v142 = vpop.permute.xlu0 %141
  %v144 = vmul.f32 %v138, %v142
  %146 = vrot.lane.b32.xlu0 %v144, 32
  %v147 = vpop.permute.xlu0 %146
  %v149 = vadd.f32 %v139, %v147
  %v150 = vtanh.pop %v149
  %152 = vrot.lane.b32.xlu0 %v150, 32
  %v153 = vpop.permute.xlu0 %152
  %v155 = vmul.f32 %v138, %v153
  %157 = vrot.lane.b32.xlu0 %v155, 64
  %v158 = vpop.permute.xlu0 %157
  %vm160 = vcmask 261120
  %v161 = vsel %vm160, %v158, 0.0
  %v163 = vlaneseq
  %v164 = vshrl.u32 %v163, 7
  %v165 = vsub.s32 0, %v164
  %v166 = vrot.slane %v44, %v165
  %vm168 = vcmask 523264
  %v170 = vsel %vm168, %v161, 0
  %172 = vmatprep.subr.mxu0 0.0
  %173 = vmatpush1.msra.mxu0 %v36
  %174 = vmatprep.subr.mxu0 0.0
  %175 = vmatpush1.msra.mxu0 %v37
  %176 = vmatprep.subr.mxu0 0.0
  %177 = vmatpush1.msra.mxu0 %v38
  %178 = vmatprep.subr.mxu0 0.0
  %179 = vmatpush1.msra.mxu0 %v39
  %180 = vmatprep.subr.mxu0 0.0
  %181 = vmatpush1.msra.mxu0 %v40
  %182 = vmatprep.subr.mxu0 0.0
  %183 = vmatpush1.msra.mxu0 %v41
  %184 = vmatprep.subr.mxu0 0.0
  %185 = vmatpush1.msra.mxu0 %v42
  %186 = vmatprep.subr.mxu0 0.0
  %187 = vmatpush1.msra.mxu0 %v43
  %188 = vmatprep.subr.mxu0 0.0
  %189 = vmatpush1.msra.mxu0 0.0
  %190 = vmatprep.subr.mxu0 0.0
  %191 = vmatpush1.msra.mxu0 0.0
  %192 = vmatprep.subr.mxu0 0.0
  %193 = vmatpush1.msra.mxu0 0.0
  %194 = vmatprep.subr.mxu0 0.0
  %195 = vmatpush1.msra.mxu0 0.0
  %196 = vmatprep.subr.mxu0 0.0
  %197 = vmatpush1.msra.mxu0 0.0
  %198 = vmatprep.subr.mxu0 0.0
  %199 = vmatpush1.msra.mxu0 0.0
  %200 = vmatprep.subr.mxu0 0.0
  %201 = vmatpush1.msra.mxu0 0.0
  %202 = vmatprep.subr.mxu0 0.0
  %203 = vmatpush1.msra.mxu0 0.0
  %204 = vmatprep.subr.mxu0 0.0
  %205 = vmatpush1.msra.mxu0 0.0
  %206 = vmatprep.subr.mxu0 0.0
  %207 = vmatpush1.msra.mxu0 0.0
  %208 = vmatprep.subr.mxu0 0.0
  %209 = vmatpush1.msra.mxu0 0.0
  %210 = vmatprep.subr.mxu0 0.0
  %211 = vmatpush1.msra.mxu0 0.0
  %212 = vmatprep.subr.mxu0 0.0
  %213 = vmatpush1.msra.mxu0 0.0
  %214 = vmatprep.subr.mxu0 0.0
  %215 = vmatpush1.msra.mxu0 0.0
  %216 = vmatprep.subr.mxu0 0.0
  %217 = vmatpush1.msra.mxu0 0.0
  %218 = vmatprep.subr.mxu0 0.0
  %219 = vmatpush1.msra.mxu0 0.0
  %220 = vmatprep.subr.mxu0 0.0
  %221 = vmatpush1.msra.mxu0 0.0
  %222 = vmatprep.subr.mxu0 0.0
  %223 = vmatpush1.msra.mxu0 0.0
  %224 = vmatprep.subr.mxu0 0.0
  %225 = vmatpush1.msra.mxu0 0.0
  %226 = vmatprep.subr.mxu0 0.0
  %227 = vmatpush1.msra.mxu0 0.0
  %228 = vmatprep.subr.mxu0 0.0
  %229 = vmatpush1.msra.mxu0 0.0
  %230 = vmatprep.subr.mxu0 0.0
  %231 = vmatpush1.msra.mxu0 0.0
  %232 = vmatprep.subr.mxu0 0.0
  %233 = vmatpush1.msra.mxu0 0.0
  %234 = vmatprep.subr.mxu0 0.0
  %235 = vmatpush1.msra.mxu0 0.0
  %236 = vmatprep.mubr.f32.mxu0 0.0
  %237 = vmatmul.mubr.f32.gmra.mrb[0].mxu0 %v170
  %v238 = vpop.f32.mrb[0].mxu0
  %v239 = vadd.f32 %v166, %v238
  %v240 = vpop.f32.mrb[0].mxu0
  %241 = vdwg.mxu0
  %v242 = vxor.u32 %v239, 2147483648
  %v243 = vmul.f32 %v242, 1.442695
  %v244 = vpow.pop %v243
  %v245 = vadd.f32 %v244, 1.0
  %v246 = vrcp.pop %v245
  %v247 = vmul.f32 1.0, %v246
  %v248 = vtanh.pop %v239
  %v249 = vsel %vm47, %v247, %v248
  %v250 = vmul.f32 %v249, 0.0
  %252 = vrot.lane.b32.xlu0 %v249, 32
  %v253 = vpop.permute.xlu0 %252
  %v255 = vmul.f32 %v249, %v253
  %257 = vrot.lane.b32.xlu0 %v255, 32
  %v258 = vpop.permute.xlu0 %257
  %v260 = vadd.f32 %v250, %v258
  %v261 = vtanh.pop %v260
  %263 = vrot.lane.b32.xlu0 %v261, 32
  %v264 = vpop.permute.xlu0 %263
  %v266 = vmul.f32 %v249, %v264
  %s267 = scalar_lea.vmem %s0, 8
  %v268 = vld [vmem:[%s267] sm:$0xff]
  %269 = vrot.lane.b32.xlu0 %v155, 80
  %v270 = vpop.permute.xlu0 %269
  %v272 = vsel %vm49, %v268, %v270
  %v274 = vsel %vm57, %v272, 0
  %276 = vmatprep.subr.mxu0 0.0
  %277 = vmatpush1.msra.mxu0 %v29
  %278 = vmatprep.subr.mxu0 0.0
  %279 = vmatpush1.msra.mxu0 %v30
  %280 = vmatprep.subr.mxu0 0.0
  %281 = vmatpush1.msra.mxu0 %v31
  %282 = vmatprep.subr.mxu0 0.0
  %283 = vmatpush1.msra.mxu0 %v32
  %284 = vmatprep.subr.mxu0 0.0
  %285 = vmatpush1.msra.mxu0 %v33
  %286 = vmatprep.subr.mxu0 0.0
  %287 = vmatpush1.msra.mxu0 %v34
  %288 = vmatprep.subr.mxu0 0.0
  %289 = vmatpush1.msra.mxu0 0.0
  %290 = vmatprep.subr.mxu0 0.0
  %291 = vmatpush1.msra.mxu0 0.0
  %292 = vmatprep.subr.mxu0 0.0
  %293 = vmatpush1.msra.mxu0 0.0
  %294 = vmatprep.subr.mxu0 0.0
  %295 = vmatpush1.msra.mxu0 0.0
  %296 = vmatprep.subr.mxu0 0.0
  %297 = vmatpush1.msra.mxu0 0.0
  %298 = vmatprep.subr.mxu0 0.0
  %299 = vmatpush1.msra.mxu0 0.0
  %300 = vmatprep.subr.mxu0 0.0
  %301 = vmatpush1.msra.mxu0 0.0
  %302 = vmatprep.subr.mxu0 0.0
  %303 = vmatpush1.msra.mxu0 0.0
  %304 = vmatprep.subr.mxu0 0.0
  %305 = vmatpush1.msra.mxu0 0.0
  %306 = vmatprep.subr.mxu0 0.0
  %307 = vmatpush1.msra.mxu0 0.0
  %308 = vmatprep.subr.mxu0 0.0
  %309 = vmatpush1.msra.mxu0 0.0
  %310 = vmatprep.subr.mxu0 0.0
  %311 = vmatpush1.msra.mxu0 0.0
  %312 = vmatprep.subr.mxu0 0.0
  %313 = vmatpush1.msra.mxu0 0.0
  %314 = vmatprep.subr.mxu0 0.0
  %315 = vmatpush1.msra.mxu0 0.0
  %316 = vmatprep.subr.mxu0 0.0
  %317 = vmatpush1.msra.mxu0 0.0
  %318 = vmatprep.subr.mxu0 0.0
  %319 = vmatpush1.msra.mxu0 0.0
  %320 = vmatprep.subr.mxu0 0.0
  %321 = vmatpush1.msra.mxu0 0.0
  %322 = vmatprep.subr.mxu0 0.0
  %323 = vmatpush1.msra.mxu0 0.0
  %324 = vmatprep.subr.mxu0 0.0
  %325 = vmatpush1.msra.mxu0 0.0
  %326 = vmatprep.subr.mxu0 0.0
  %327 = vmatpush1.msra.mxu0 0.0
  %328 = vmatprep.subr.mxu0 0.0
  %329 = vmatpush1.msra.mxu0 0.0
  %330 = vmatprep.subr.mxu0 0.0
  %331 = vmatpush1.msra.mxu0 0.0
  %332 = vmatprep.subr.mxu0 0.0
  %333 = vmatpush1.msra.mxu0 0.0
  %334 = vmatprep.subr.mxu0 0.0
  %335 = vmatpush1.msra.mxu0 0.0
  %336 = vmatprep.subr.mxu0 0.0
  %337 = vmatpush1.msra.mxu0 0.0
  %338 = vmatprep.subr.mxu0 0.0
  %339 = vmatpush1.msra.mxu0 0.0
  %340 = vmatprep.mubr.f32.mxu0 0.0
  %341 = vmatmul.mubr.f32.gmra.mrb[0].mxu0 %v274
  %v342 = vpop.f32.mrb[0].mxu0
  %v343 = vadd.f32 %v55, %v342
  %v344 = vpop.f32.mrb[0].mxu0
  %345 = vdwg.mxu0
  %v346 = vxor.u32 %v343, 2147483648
  %v347 = vmul.f32 %v346, 1.442695
  %v348 = vpow.pop %v347
  %v349 = vadd.f32 %v348, 1.0
  %v350 = vrcp.pop %v349
  %v351 = vmul.f32 1.0, %v350
  %v352 = vtanh.pop %v343
  %v353 = vsel %vm47, %v351, %v352
  %v354 = vmul.f32 %v353, %v149
  %356 = vrot.lane.b32.xlu0 %v353, 32
  %v357 = vpop.permute.xlu0 %356
  %v359 = vmul.f32 %v353, %v357
  %361 = vrot.lane.b32.xlu0 %v359, 32
  %v362 = vpop.permute.xlu0 %361
  %v364 = vadd.f32 %v354, %v362
  %v365 = vtanh.pop %v364
  %367 = vrot.lane.b32.xlu0 %v365, 32
  %v368 = vpop.permute.xlu0 %367
  %v370 = vmul.f32 %v353, %v368
  %372 = vrot.lane.b32.xlu0 %v370, 64
  %v373 = vpop.permute.xlu0 %372
  %376 = vrot.lane.b32.xlu0 %v266, 96
  %v377 = vpop.permute.xlu0 %376
  %v379 = vsel %vm160, %v373, %v377
  %v381 = vsel %vm168, %v379, 0
  %383 = vmatprep.subr.mxu0 0.0
  %384 = vmatpush1.msra.mxu0 %v36
  %385 = vmatprep.subr.mxu0 0.0
  %386 = vmatpush1.msra.mxu0 %v37
  %387 = vmatprep.subr.mxu0 0.0
  %388 = vmatpush1.msra.mxu0 %v38
  %389 = vmatprep.subr.mxu0 0.0
  %390 = vmatpush1.msra.mxu0 %v39
  %391 = vmatprep.subr.mxu0 0.0
  %392 = vmatpush1.msra.mxu0 %v40
  %393 = vmatprep.subr.mxu0 0.0
  %394 = vmatpush1.msra.mxu0 %v41
  %395 = vmatprep.subr.mxu0 0.0
  %396 = vmatpush1.msra.mxu0 %v42
  %397 = vmatprep.subr.mxu0 0.0
  %398 = vmatpush1.msra.mxu0 %v43
  %399 = vmatprep.subr.mxu0 0.0
  %400 = vmatpush1.msra.mxu0 0.0
  %401 = vmatprep.subr.mxu0 0.0
  %402 = vmatpush1.msra.mxu0 0.0
  %403 = vmatprep.subr.mxu0 0.0
  %404 = vmatpush1.msra.mxu0 0.0
  %405 = vmatprep.subr.mxu0 0.0
  %406 = vmatpush1.msra.mxu0 0.0
  %407 = vmatprep.subr.mxu0 0.0
  %408 = vmatpush1.msra.mxu0 0.0
  %409 = vmatprep.subr.mxu0 0.0
  %410 = vmatpush1.msra.mxu0 0.0
  %411 = vmatprep.subr.mxu0 0.0
  %412 = vmatpush1.msra.mxu0 0.0
  %413 = vmatprep.subr.mxu0 0.0
  %414 = vmatpush1.msra.mxu0 0.0
  %415 = vmatprep.subr.mxu0 0.0
  %416 = vmatpush1.msra.mxu0 0.0
  %417 = vmatprep.subr.mxu0 0.0
  %418 = vmatpush1.msra.mxu0 0.0
  %419 = vmatprep.subr.mxu0 0.0
  %420 = vmatpush1.msra.mxu0 0.0
  %421 = vmatprep.subr.mxu0 0.0
  %422 = vmatpush1.msra.mxu0 0.0
  %423 = vmatprep.subr.mxu0 0.0
  %424 = vmatpush1.msra.mxu0 0.0
  %425 = vmatprep.subr.mxu0 0.0
  %426 = vmatpush1.msra.mxu0 0.0
  %427 = vmatprep.subr.mxu0 0.0
  %428 = vmatpush1.msra.mxu0 0.0
  %429 = vmatprep.subr.mxu0 0.0
  %430 = vmatpush1.msra.mxu0 0.0
  %431 = vmatprep.subr.mxu0 0.0
  %432 = vmatpush1.msra.mxu0 0.0
  %433 = vmatprep.subr.mxu0 0.0
  %434 = vmatpush1.msra.mxu0 0.0
  %435 = vmatprep.subr.mxu0 0.0
  %436 = vmatpush1.msra.mxu0 0.0
  %437 = vmatprep.subr.mxu0 0.0
  %438 = vmatpush1.msra.mxu0 0.0
  %439 = vmatprep.subr.mxu0 0.0
  %440 = vmatpush1.msra.mxu0 0.0
  %441 = vmatprep.subr.mxu0 0.0
  %442 = vmatpush1.msra.mxu0 0.0
  %443 = vmatprep.subr.mxu0 0.0
  %444 = vmatpush1.msra.mxu0 0.0
  %445 = vmatprep.subr.mxu0 0.0
  %446 = vmatpush1.msra.mxu0 0.0
  %447 = vmatprep.mubr.f32.mxu0 0.0
  %448 = vmatmul.mubr.f32.gmra.mrb[0].mxu0 %v381
  %v449 = vpop.f32.mrb[0].mxu0
  %v450 = vadd.f32 %v166, %v449
  %v451 = vpop.f32.mrb[0].mxu0
  %452 = vdwg.mxu0
  %v453 = vxor.u32 %v450, 2147483648
  %v454 = vmul.f32 %v453, 1.442695
  %v455 = vpow.pop %v454
  %v456 = vadd.f32 %v455, 1.0
  %v457 = vrcp.pop %v456
  %v458 = vmul.f32 1.0, %v457
  %v459 = vtanh.pop %v450
  %v460 = vsel %vm47, %v458, %v459
  %v461 = vmul.f32 %v460, %v260
  %463 = vrot.lane.b32.xlu0 %v460, 32
  %v464 = vpop.permute.xlu0 %463
  %v466 = vmul.f32 %v460, %v464
  %468 = vrot.lane.b32.xlu0 %v466, 32
  %v469 = vpop.permute.xlu0 %468
  %v471 = vadd.f32 %v461, %v469
  %v472 = vtanh.pop %v471
  %474 = vrot.lane.b32.xlu0 %v472, 32
  %v475 = vpop.permute.xlu0 %474
  %v477 = vmul.f32 %v460, %v475
  %s478 = scalar_lea.vmem %s0, 16
  %v479 = vld [vmem:[%s478] sm:$0xff]
  %480 = vrot.lane.b32.xlu0 %v370, 80
  %v481 = vpop.permute.xlu0 %480
  %v483 = vsel %vm49, %v479, %v481
  %v485 = vsel %vm57, %v483, 0
  %487 = vmatprep.subr.mxu0 0.0
  %488 = vmatpush1.msra.mxu0 %v29
  %489 = vmatprep.subr.mxu0 0.0
  %490 = vmatpush1.msra.mxu0 %v30
  %491 = vmatprep.subr.mxu0 0.0
  %492 = vmatpush1.msra.mxu0 %v31
  %493 = vmatprep.subr.mxu0 0.0
  %494 = vmatpush1.msra.mxu0 %v32
  %495 = vmatprep.subr.mxu0 0.0
  %496 = vmatpush1.msra.mxu0 %v33
  %497 = vmatprep.subr.mxu0 0.0
  %498 = vmatpush1.msra.mxu0 %v34
  %499 = vmatprep.subr.mxu0 0.0
  %500 = vmatpush1.msra.mxu0 0.0
  %501 = vmatprep.subr.mxu0 0.0
  %502 = vmatpush1.msra.mxu0 0.0
  %503 = vmatprep.subr.mxu0 0.0
  %504 = vmatpush1.msra.mxu0 0.0
  %505 = vmatprep.subr.mxu0 0.0
  %506 = vmatpush1.msra.mxu0 0.0
  %507 = vmatprep.subr.mxu0 0.0
  %508 = vmatpush1.msra.mxu0 0.0
  %509 = vmatprep.subr.mxu0 0.0
  %510 = vmatpush1.msra.mxu0 0.0
  %511 = vmatprep.subr.mxu0 0.0
  %512 = vmatpush1.msra.mxu0 0.0
  %513 = vmatprep.subr.mxu0 0.0
  %514 = vmatpush1.msra.mxu0 0.0
  %515 = vmatprep.subr.mxu0 0.0
  %516 = vmatpush1.msra.mxu0 0.0
  %517 = vmatprep.subr.mxu0 0.0
  %518 = vmatpush1.msra.mxu0 0.0
  %519 = vmatprep.subr.mxu0 0.0
  %520 = vmatpush1.msra.mxu0 0.0
  %521 = vmatprep.subr.mxu0 0.0
  %522 = vmatpush1.msra.mxu0 0.0
  %523 = vmatprep.subr.mxu0 0.0
  %524 = vmatpush1.msra.mxu0 0.0
  %525 = vmatprep.subr.mxu0 0.0
  %526 = vmatpush1.msra.mxu0 0.0
  %527 = vmatprep.subr.mxu0 0.0
  %528 = vmatpush1.msra.mxu0 0.0
  %529 = vmatprep.subr.mxu0 0.0
  %530 = vmatpush1.msra.mxu0 0.0
  %531 = vmatprep.subr.mxu0 0.0
  %532 = vmatpush1.msra.mxu0 0.0
  %533 = vmatprep.subr.mxu0 0.0
  %534 = vmatpush1.msra.mxu0 0.0
  %535 = vmatprep.subr.mxu0 0.0
  %536 = vmatpush1.msra.mxu0 0.0
  %537 = vmatprep.subr.mxu0 0.0
  %538 = vmatpush1.msra.mxu0 0.0
  %539 = vmatprep.subr.mxu0 0.0
  %540 = vmatpush1.msra.mxu0 0.0
  %541 = vmatprep.subr.mxu0 0.0
  %542 = vmatpush1.msra.mxu0 0.0
  %543 = vmatprep.subr.mxu0 0.0
  %544 = vmatpush1.msra.mxu0 0.0
  %545 = vmatprep.subr.mxu0 0.0
  %546 = vmatpush1.msra.mxu0 0.0
  %547 = vmatprep.subr.mxu0 0.0
  %548 = vmatpush1.msra.mxu0 0.0
  %549 = vmatprep.subr.mxu0 0.0
  %550 = vmatpush1.msra.mxu0 0.0
  %551 = vmatprep.mubr.f32.mxu0 0.0
  %552 = vmatmul.mubr.f32.gmra.mrb[0].mxu0 %v485
  %v553 = vpop.f32.mrb[0].mxu0
  %v554 = vadd.f32 %v55, %v553
  %v555 = vpop.f32.mrb[0].mxu0
  %556 = vdwg.mxu0
  %v557 = vxor.u32 %v554, 2147483648
  %v558 = vmul.f32 %v557, 1.442695
  %v559 = vpow.pop %v558
  %v560 = vadd.f32 %v559, 1.0
  %v561 = vrcp.pop %v560
  %v562 = vmul.f32 1.0, %v561
  %v563 = vtanh.pop %v554
  %v564 = vsel %vm47, %v562, %v563
  %v565 = vmul.f32 %v564, %v364
  %567 = vrot.lane.b32.xlu0 %v564, 32
  %v568 = vpop.permute.xlu0 %567
  %v570 = vmul.f32 %v564, %v568
  %572 = vrot.lane.b32.xlu0 %v570, 32
  %v573 = vpop.permute.xlu0 %572
  %v575 = vadd.f32 %v565, %v573
  %v576 = vtanh.pop %v575
  %578 = vrot.lane.b32.xlu0 %v576, 32
  %v579 = vpop.permute.xlu0 %578
  %v581 = vmul.f32 %v564, %v579
  %583 = vrot.lane.b32.xlu0 %v581, 64
  %v584 = vpop.permute.xlu0 %583
  %587 = vrot.lane.b32.xlu0 %v477, 96
  %v588 = vpop.permute.xlu0 %587
  %v590 = vsel %vm160, %v584, %v588
  %v592 = vsel %vm168, %v590, 0
  %594 = vmatprep.subr.mxu0 0.0
  %595 = vmatpush1.msra.mxu0 %v36
  %596 = vmatprep.subr.mxu0 0.0
  %597 = vmatpush1.msra.mxu0 %v37
  %598 = vmatprep.subr.mxu0 0.0
  %599 = vmatpush1.msra.mxu0 %v38
  %600 = vmatprep.subr.mxu0 0.0
  %601 = vmatpush1.msra.mxu0 %v39
  %602 = vmatprep.subr.mxu0 0.0
  %603 = vmatpush1.msra.mxu0 %v40
  %604 = vmatprep.subr.mxu0 0.0
  %605 = vmatpush1.msra.mxu0 %v41
  %606 = vmatprep.subr.mxu0 0.0
  %607 = vmatpush1.msra.mxu0 %v42
  %608 = vmatprep.subr.mxu0 0.0
  %609 = vmatpush1.msra.mxu0 %v43
  %610 = vmatprep.subr.mxu0 0.0
  %611 = vmatpush1.msra.mxu0 0.0
  %612 = vmatprep.subr.mxu0 0.0
  %613 = vmatpush1.msra.mxu0 0.0
  %614 = vmatprep.subr.mxu0 0.0
  %615 = vmatpush1.msra.mxu0 0.0
  %616 = vmatprep.subr.mxu0 0.0
  %617 = vmatpush1.msra.mxu0 0.0
  %618 = vmatprep.subr.mxu0 0.0
  %619 = vmatpush1.msra.mxu0 0.0
  %620 = vmatprep.subr.mxu0 0.0
  %621 = vmatpush1.msra.mxu0 0.0
  %622 = vmatprep.subr.mxu0 0.0
  %623 = vmatpush1.msra.mxu0 0.0
  %624 = vmatprep.subr.mxu0 0.0
  %625 = vmatpush1.msra.mxu0 0.0
  %626 = vmatprep.subr.mxu0 0.0
  %627 = vmatpush1.msra.mxu0 0.0
  %628 = vmatprep.subr.mxu0 0.0
  %629 = vmatpush1.msra.mxu0 0.0
  %630 = vmatprep.subr.mxu0 0.0
  %631 = vmatpush1.msra.mxu0 0.0
  %632 = vmatprep.subr.mxu0 0.0
  %633 = vmatpush1.msra.mxu0 0.0
  %634 = vmatprep.subr.mxu0 0.0
  %635 = vmatpush1.msra.mxu0 0.0
  %636 = vmatprep.subr.mxu0 0.0
  %637 = vmatpush1.msra.mxu0 0.0
  %638 = vmatprep.subr.mxu0 0.0
  %639 = vmatpush1.msra.mxu0 0.0
  %640 = vmatprep.subr.mxu0 0.0
  %641 = vmatpush1.msra.mxu0 0.0
  %642 = vmatprep.subr.mxu0 0.0
  %643 = vmatpush1.msra.mxu0 0.0
  %644 = vmatprep.subr.mxu0 0.0
  %645 = vmatpush1.msra.mxu0 0.0
  %646 = vmatprep.subr.mxu0 0.0
  %647 = vmatpush1.msra.mxu0 0.0
  %648 = vmatprep.subr.mxu0 0.0
  %649 = vmatpush1.msra.mxu0 0.0
  %650 = vmatprep.subr.mxu0 0.0
  %651 = vmatpush1.msra.mxu0 0.0
  %652 = vmatprep.subr.mxu0 0.0
  %653 = vmatpush1.msra.mxu0 0.0
  %654 = vmatprep.subr.mxu0 0.0
  %655 = vmatpush1.msra.mxu0 0.0
  %656 = vmatprep.subr.mxu0 0.0
  %657 = vmatpush1.msra.mxu0 0.0
  %658 = vmatprep.mubr.f32.mxu0 0.0
  %659 = vmatmul.mubr.f32.gmra.mrb[0].mxu0 %v592
  %v660 = vpop.f32.mrb[0].mxu0
  %v661 = vadd.f32 %v166, %v660
  %v662 = vpop.f32.mrb[0].mxu0
  %663 = vdwg.mxu0
  %v664 = vxor.u32 %v661, 2147483648
  %v665 = vmul.f32 %v664, 1.442695
  %v666 = vpow.pop %v665
  %v667 = vadd.f32 %v666, 1.0
  %v668 = vrcp.pop %v667
  %v669 = vmul.f32 1.0, %v668
  %v670 = vtanh.pop %v661
  %v671 = vsel %vm47, %v669, %v670
  %v672 = vmul.f32 %v671, %v471
  %674 = vrot.lane.b32.xlu0 %v671, 32
  %v675 = vpop.permute.xlu0 %674
  %v677 = vmul.f32 %v671, %v675
  %679 = vrot.lane.b32.xlu0 %v677, 32
  %v680 = vpop.permute.xlu0 %679
  %v682 = vadd.f32 %v672, %v680
  %v683 = vtanh.pop %v682
  %685 = vrot.lane.b32.xlu0 %v683, 32
  %v686 = vpop.permute.xlu0 %685
  %v688 = vmul.f32 %v671, %v686
  %s689 = scalar_lea.vmem %s0, 24
  %v690 = vld [vmem:[%s689] sm:$0xff]
  %691 = vrot.lane.b32.xlu0 %v581, 80
  %v692 = vpop.permute.xlu0 %691
  %v694 = vsel %vm49, %v690, %v692
  %v696 = vsel %vm57, %v694, 0
  %698 = vmatprep.subr.mxu0 0.0
  %699 = vmatpush1.msra.mxu0 %v29
  %700 = vmatprep.subr.mxu0 0.0
  %701 = vmatpush1.msra.mxu0 %v30
  %702 = vmatprep.subr.mxu0 0.0
  %703 = vmatpush1.msra.mxu0 %v31
  %704 = vmatprep.subr.mxu0 0.0
  %705 = vmatpush1.msra.mxu0 %v32
  %706 = vmatprep.subr.mxu0 0.0
  %707 = vmatpush1.msra.mxu0 %v33
  %708 = vmatprep.subr.mxu0 0.0
  %709 = vmatpush1.msra.mxu0 %v34
  %710 = vmatprep.subr.mxu0 0.0
  %711 = vmatpush1.msra.mxu0 0.0
  %712 = vmatprep.subr.mxu0 0.0
  %713 = vmatpush1.msra.mxu0 0.0
  %714 = vmatprep.subr.mxu0 0.0
  %715 = vmatpush1.msra.mxu0 0.0
  %716 = vmatprep.subr.mxu0 0.0
  %717 = vmatpush1.msra.mxu0 0.0
  %718 = vmatprep.subr.mxu0 0.0
  %719 = vmatpush1.msra.mxu0 0.0
  %720 = vmatprep.subr.mxu0 0.0
  %721 = vmatpush1.msra.mxu0 0.0
  %722 = vmatprep.subr.mxu0 0.0
  %723 = vmatpush1.msra.mxu0 0.0
  %724 = vmatprep.subr.mxu0 0.0
  %725 = vmatpush1.msra.mxu0 0.0
  %726 = vmatprep.subr.mxu0 0.0
  %727 = vmatpush1.msra.mxu0 0.0
  %728 = vmatprep.subr.mxu0 0.0
  %729 = vmatpush1.msra.mxu0 0.0
  %730 = vmatprep.subr.mxu0 0.0
  %731 = vmatpush1.msra.mxu0 0.0
  %732 = vmatprep.subr.mxu0 0.0
  %733 = vmatpush1.msra.mxu0 0.0
  %734 = vmatprep.subr.mxu0 0.0
  %735 = vmatpush1.msra.mxu0 0.0
  %736 = vmatprep.subr.mxu0 0.0
  %737 = vmatpush1.msra.mxu0 0.0
  %738 = vmatprep.subr.mxu0 0.0
  %739 = vmatpush1.msra.mxu0 0.0
  %740 = vmatprep.subr.mxu0 0.0
  %741 = vmatpush1.msra.mxu0 0.0
  %742 = vmatprep.subr.mxu0 0.0
  %743 = vmatpush1.msra.mxu0 0.0
  %744 = vmatprep.subr.mxu0 0.0
  %745 = vmatpush1.msra.mxu0 0.0
  %746 = vmatprep.subr.mxu0 0.0
  %747 = vmatpush1.msra.mxu0 0.0
  %748 = vmatprep.subr.mxu0 0.0
  %749 = vmatpush1.msra.mxu0 0.0
  %750 = vmatprep.subr.mxu0 0.0
  %751 = vmatpush1.msra.mxu0 0.0
  %752 = vmatprep.subr.mxu0 0.0
  %753 = vmatpush1.msra.mxu0 0.0
  %754 = vmatprep.subr.mxu0 0.0
  %755 = vmatpush1.msra.mxu0 0.0
  %756 = vmatprep.subr.mxu0 0.0
  %757 = vmatpush1.msra.mxu0 0.0
  %758 = vmatprep.subr.mxu0 0.0
  %759 = vmatpush1.msra.mxu0 0.0
  %760 = vmatprep.subr.mxu0 0.0
  %761 = vmatpush1.msra.mxu0 0.0
  %762 = vmatprep.mubr.f32.mxu0 0.0
  %763 = vmatmul.mubr.f32.gmra.mrb[0].mxu0 %v696
  %v764 = vpop.f32.mrb[0].mxu0
  %v765 = vadd.f32 %v55, %v764
  %v766 = vpop.f32.mrb[0].mxu0
  %767 = vdwg.mxu0
  %v768 = vxor.u32 %v765, 2147483648
  %v769 = vmul.f32 %v768, 1.442695
  %v770 = vpow.pop %v769
  %v771 = vadd.f32 %v770, 1.0
  %v772 = vrcp.pop %v771
  %v773 = vmul.f32 1.0, %v772
  %v774 = vtanh.pop %v765
  %v775 = vsel %vm47, %v773, %v774
  %v776 = vmul.f32 %v775, %v575
  %778 = vrot.lane.b32.xlu0 %v775, 32
  %v779 = vpop.permute.xlu0 %778
  %v781 = vmul.f32 %v775, %v779
  %783 = vrot.lane.b32.xlu0 %v781, 32
  %v784 = vpop.permute.xlu0 %783
  %v786 = vadd.f32 %v776, %v784
  %v787 = vtanh.pop %v786
  %789 = vrot.lane.b32.xlu0 %v787, 32
  %v790 = vpop.permute.xlu0 %789
  %v792 = vmul.f32 %v775, %v790
  %794 = vrot.lane.b32.xlu0 %v792, 64
  %v795 = vpop.permute.xlu0 %794
  %798 = vrot.lane.b32.xlu0 %v688, 96
  %v799 = vpop.permute.xlu0 %798
  %v801 = vsel %vm160, %v795, %v799
  %v803 = vsel %vm168, %v801, 0
  %805 = vmatprep.subr.mxu0 0.0
  %806 = vmatpush1.msra.mxu0 %v36
  %807 = vmatprep.subr.mxu0 0.0
  %808 = vmatpush1.msra.mxu0 %v37
  %809 = vmatprep.subr.mxu0 0.0
  %810 = vmatpush1.msra.mxu0 %v38
  %811 = vmatprep.subr.mxu0 0.0
  %812 = vmatpush1.msra.mxu0 %v39
  %813 = vmatprep.subr.mxu0 0.0
  %814 = vmatpush1.msra.mxu0 %v40
  %815 = vmatprep.subr.mxu0 0.0
  %816 = vmatpush1.msra.mxu0 %v41
  %817 = vmatprep.subr.mxu0 0.0
  %818 = vmatpush1.msra.mxu0 %v42
  %819 = vmatprep.subr.mxu0 0.0
  %820 = vmatpush1.msra.mxu0 %v43
  %821 = vmatprep.subr.mxu0 0.0
  %822 = vmatpush1.msra.mxu0 0.0
  %823 = vmatprep.subr.mxu0 0.0
  %824 = vmatpush1.msra.mxu0 0.0
  %825 = vmatprep.subr.mxu0 0.0
  %826 = vmatpush1.msra.mxu0 0.0
  %827 = vmatprep.subr.mxu0 0.0
  %828 = vmatpush1.msra.mxu0 0.0
  %829 = vmatprep.subr.mxu0 0.0
  %830 = vmatpush1.msra.mxu0 0.0
  %831 = vmatprep.subr.mxu0 0.0
  %832 = vmatpush1.msra.mxu0 0.0
  %833 = vmatprep.subr.mxu0 0.0
  %834 = vmatpush1.msra.mxu0 0.0
  %835 = vmatprep.subr.mxu0 0.0
  %836 = vmatpush1.msra.mxu0 0.0
  %837 = vmatprep.subr.mxu0 0.0
  %838 = vmatpush1.msra.mxu0 0.0
  %839 = vmatprep.subr.mxu0 0.0
  %840 = vmatpush1.msra.mxu0 0.0
  %841 = vmatprep.subr.mxu0 0.0
  %842 = vmatpush1.msra.mxu0 0.0
  %843 = vmatprep.subr.mxu0 0.0
  %844 = vmatpush1.msra.mxu0 0.0
  %845 = vmatprep.subr.mxu0 0.0
  %846 = vmatpush1.msra.mxu0 0.0
  %847 = vmatprep.subr.mxu0 0.0
  %848 = vmatpush1.msra.mxu0 0.0
  %849 = vmatprep.subr.mxu0 0.0
  %850 = vmatpush1.msra.mxu0 0.0
  %851 = vmatprep.subr.mxu0 0.0
  %852 = vmatpush1.msra.mxu0 0.0
  %853 = vmatprep.subr.mxu0 0.0
  %854 = vmatpush1.msra.mxu0 0.0
  %855 = vmatprep.subr.mxu0 0.0
  %856 = vmatpush1.msra.mxu0 0.0
  %857 = vmatprep.subr.mxu0 0.0
  %858 = vmatpush1.msra.mxu0 0.0
  %859 = vmatprep.subr.mxu0 0.0
  %860 = vmatpush1.msra.mxu0 0.0
  %861 = vmatprep.subr.mxu0 0.0
  %862 = vmatpush1.msra.mxu0 0.0
  %863 = vmatprep.subr.mxu0 0.0
  %864 = vmatpush1.msra.mxu0 0.0
  %865 = vmatprep.subr.mxu0 0.0
  %866 = vmatpush1.msra.mxu0 0.0
  %867 = vmatprep.subr.mxu0 0.0
  %868 = vmatpush1.msra.mxu0 0.0
  %869 = vmatprep.mubr.f32.mxu0 0.0
  %870 = vmatmul.mubr.f32.gmra.mrb[0].mxu0 %v803
  %v871 = vpop.f32.mrb[0].mxu0
  %v872 = vadd.f32 %v166, %v871
  %v873 = vpop.f32.mrb[0].mxu0
  %874 = vdwg.mxu0
  %v875 = vxor.u32 %v872, 2147483648
  %v876 = vmul.f32 %v875, 1.442695
  %v877 = vpow.pop %v876
  %v878 = vadd.f32 %v877, 1.0
  %v879 = vrcp.pop %v878
  %v880 = vmul.f32 1.0, %v879
  %v881 = vtanh.pop %v872
  %v882 = vsel %vm47, %v880, %v881
  %v883 = vmul.f32 %v882, %v682
  %885 = vrot.lane.b32.xlu0 %v882, 32
  %v886 = vpop.permute.xlu0 %885
  %v888 = vmul.f32 %v882, %v886
  %890 = vrot.lane.b32.xlu0 %v888, 32
  %v891 = vpop.permute.xlu0 %890
  %v893 = vadd.f32 %v883, %v891
  %v894 = vtanh.pop %v893
  %896 = vrot.lane.b32.xlu0 %v894, 32
  %v897 = vpop.permute.xlu0 %896
  %v899 = vmul.f32 %v882, %v897
  %s900 = scalar_lea.vmem %s0, 32
  %v901 = vld [vmem:[%s900] sm:$0xff]
  %902 = vrot.lane.b32.xlu0 %v792, 80
  %v903 = vpop.permute.xlu0 %902
  %v905 = vsel %vm49, %v901, %v903
  %v907 = vsel %vm57, %v905, 0
  %909 = vmatprep.subr.mxu0 0.0
  %910 = vmatpush1.msra.mxu0 %v29
  %911 = vmatprep.subr.mxu0 0.0
  %912 = vmatpush1.msra.mxu0 %v30
  %913 = vmatprep.subr.mxu0 0.0
  %914 = vmatpush1.msra.mxu0 %v31
  %915 = vmatprep.subr.mxu0 0.0
  %916 = vmatpush1.msra.mxu0 %v32
  %917 = vmatprep.subr.mxu0 0.0
  %918 = vmatpush1.msra.mxu0 %v33
  %919 = vmatprep.subr.mxu0 0.0
  %920 = vmatpush1.msra.mxu0 %v34
  %921 = vmatprep.subr.mxu0 0.0
  %922 = vmatpush1.msra.mxu0 0.0
  %923 = vmatprep.subr.mxu0 0.0
  %924 = vmatpush1.msra.mxu0 0.0
  %925 = vmatprep.subr.mxu0 0.0
  %926 = vmatpush1.msra.mxu0 0.0
  %927 = vmatprep.subr.mxu0 0.0
  %928 = vmatpush1.msra.mxu0 0.0
  %929 = vmatprep.subr.mxu0 0.0
  %930 = vmatpush1.msra.mxu0 0.0
  %931 = vmatprep.subr.mxu0 0.0
  %932 = vmatpush1.msra.mxu0 0.0
  %933 = vmatprep.subr.mxu0 0.0
  %934 = vmatpush1.msra.mxu0 0.0
  %935 = vmatprep.subr.mxu0 0.0
  %936 = vmatpush1.msra.mxu0 0.0
  %937 = vmatprep.subr.mxu0 0.0
  %938 = vmatpush1.msra.mxu0 0.0
  %939 = vmatprep.subr.mxu0 0.0
  %940 = vmatpush1.msra.mxu0 0.0
  %941 = vmatprep.subr.mxu0 0.0
  %942 = vmatpush1.msra.mxu0 0.0
  %943 = vmatprep.subr.mxu0 0.0
  %944 = vmatpush1.msra.mxu0 0.0
  %945 = vmatprep.subr.mxu0 0.0
  %946 = vmatpush1.msra.mxu0 0.0
  %947 = vmatprep.subr.mxu0 0.0
  %948 = vmatpush1.msra.mxu0 0.0
  %949 = vmatprep.subr.mxu0 0.0
  %950 = vmatpush1.msra.mxu0 0.0
  %951 = vmatprep.subr.mxu0 0.0
  %952 = vmatpush1.msra.mxu0 0.0
  %953 = vmatprep.subr.mxu0 0.0
  %954 = vmatpush1.msra.mxu0 0.0
  %955 = vmatprep.subr.mxu0 0.0
  %956 = vmatpush1.msra.mxu0 0.0
  %957 = vmatprep.subr.mxu0 0.0
  %958 = vmatpush1.msra.mxu0 0.0
  %959 = vmatprep.subr.mxu0 0.0
  %960 = vmatpush1.msra.mxu0 0.0
  %961 = vmatprep.subr.mxu0 0.0
  %962 = vmatpush1.msra.mxu0 0.0
  %963 = vmatprep.subr.mxu0 0.0
  %964 = vmatpush1.msra.mxu0 0.0
  %965 = vmatprep.subr.mxu0 0.0
  %966 = vmatpush1.msra.mxu0 0.0
  %967 = vmatprep.subr.mxu0 0.0
  %968 = vmatpush1.msra.mxu0 0.0
  %969 = vmatprep.subr.mxu0 0.0
  %970 = vmatpush1.msra.mxu0 0.0
  %971 = vmatprep.subr.mxu0 0.0
  %972 = vmatpush1.msra.mxu0 0.0
  %973 = vmatprep.mubr.f32.mxu0 0.0
  %974 = vmatmul.mubr.f32.gmra.mrb[0].mxu0 %v907
  %v975 = vpop.f32.mrb[0].mxu0
  %v976 = vadd.f32 %v55, %v975
  %v977 = vpop.f32.mrb[0].mxu0
  %978 = vdwg.mxu0
  %v979 = vxor.u32 %v976, 2147483648
  %v980 = vmul.f32 %v979, 1.442695
  %v981 = vpow.pop %v980
  %v982 = vadd.f32 %v981, 1.0
  %v983 = vrcp.pop %v982
  %v984 = vmul.f32 1.0, %v983
  %v985 = vtanh.pop %v976
  %v986 = vsel %vm47, %v984, %v985
  %v987 = vmul.f32 %v986, %v786
  %989 = vrot.lane.b32.xlu0 %v986, 32
  %v990 = vpop.permute.xlu0 %989
  %v992 = vmul.f32 %v986, %v990
  %994 = vrot.lane.b32.xlu0 %v992, 32
  %v995 = vpop.permute.xlu0 %994
  %v997 = vadd.f32 %v987, %v995
  %v998 = vtanh.pop %v997
  %1000 = vrot.lane.b32.xlu0 %v998, 32
  %v1001 = vpop.permute.xlu0 %1000
  %v1003 = vmul.f32 %v986, %v1001
  %1005 = vrot.lane.b32.xlu0 %v1003, 64
  %v1006 = vpop.permute.xlu0 %1005
  %1009 = vrot.lane.b32.xlu0 %v899, 96
  %v1010 = vpop.permute.xlu0 %1009
  %v1012 = vsel %vm160, %v1006, %v1010
  %v1014 = vsel %vm168, %v1012, 0
  %1016 = vmatprep.subr.mxu0 0.0
  %1017 = vmatpush1.msra.mxu0 %v36
  %1018 = vmatprep.subr.mxu0 0.0
  %1019 = vmatpush1.msra.mxu0 %v37
  %1020 = vmatprep.subr.mxu0 0.0
  %1021 = vmatpush1.msra.mxu0 %v38
  %1022 = vmatprep.subr.mxu0 0.0
  %1023 = vmatpush1.msra.mxu0 %v39
  %1024 = vmatprep.subr.mxu0 0.0
  %1025 = vmatpush1.msra.mxu0 %v40
  %1026 = vmatprep.subr.mxu0 0.0
  %1027 = vmatpush1.msra.mxu0 %v41
  %1028 = vmatprep.subr.mxu0 0.0
  %1029 = vmatpush1.msra.mxu0 %v42
  %1030 = vmatprep.subr.mxu0 0.0
  %1031 = vmatpush1.msra.mxu0 %v43
  %1032 = vmatprep.subr.mxu0 0.0
  %1033 = vmatpush1.msra.mxu0 0.0
  %1034 = vmatprep.subr.mxu0 0.0
  %1035 = vmatpush1.msra.mxu0 0.0
  %1036 = vmatprep.subr.mxu0 0.0
  %1037 = vmatpush1.msra.mxu0 0.0
  %1038 = vmatprep.subr.mxu0 0.0
  %1039 = vmatpush1.msra.mxu0 0.0
  %1040 = vmatprep.subr.mxu0 0.0
  %1041 = vmatpush1.msra.mxu0 0.0
  %1042 = vmatprep.subr.mxu0 0.0
  %1043 = vmatpush1.msra.mxu0 0.0
  %1044 = vmatprep.subr.mxu0 0.0
  %1045 = vmatpush1.msra.mxu0 0.0
  %1046 = vmatprep.subr.mxu0 0.0
  %1047 = vmatpush1.msra.mxu0 0.0
  %1048 = vmatprep.subr.mxu0 0.0
  %1049 = vmatpush1.msra.mxu0 0.0
  %1050 = vmatprep.subr.mxu0 0.0
  %1051 = vmatpush1.msra.mxu0 0.0
  %1052 = vmatprep.subr.mxu0 0.0
  %1053 = vmatpush1.msra.mxu0 0.0
  %1054 = vmatprep.subr.mxu0 0.0
  %1055 = vmatpush1.msra.mxu0 0.0
  %1056 = vmatprep.subr.mxu0 0.0
  %1057 = vmatpush1.msra.mxu0 0.0
  %1058 = vmatprep.subr.mxu0 0.0
  %1059 = vmatpush1.msra.mxu0 0.0
  %1060 = vmatprep.subr.mxu0 0.0
  %1061 = vmatpush1.msra.mxu0 0.0
  %1062 = vmatprep.subr.mxu0 0.0
  %1063 = vmatpush1.msra.mxu0 0.0
  %1064 = vmatprep.subr.mxu0 0.0
  %1065 = vmatpush1.msra.mxu0 0.0
  %1066 = vmatprep.subr.mxu0 0.0
  %1067 = vmatpush1.msra.mxu0 0.0
  %1068 = vmatprep.subr.mxu0 0.0
  %1069 = vmatpush1.msra.mxu0 0.0
  %1070 = vmatprep.subr.mxu0 0.0
  %1071 = vmatpush1.msra.mxu0 0.0
  %1072 = vmatprep.subr.mxu0 0.0
  %1073 = vmatpush1.msra.mxu0 0.0
  %1074 = vmatprep.subr.mxu0 0.0
  %1075 = vmatpush1.msra.mxu0 0.0
  %1076 = vmatprep.subr.mxu0 0.0
  %1077 = vmatpush1.msra.mxu0 0.0
  %1078 = vmatprep.subr.mxu0 0.0
  %1079 = vmatpush1.msra.mxu0 0.0
  %1080 = vmatprep.mubr.f32.mxu0 0.0
  %1081 = vmatmul.mubr.f32.gmra.mrb[0].mxu0 %v1014
  %v1082 = vpop.f32.mrb[0].mxu0
  %v1083 = vadd.f32 %v166, %v1082
  %v1084 = vpop.f32.mrb[0].mxu0
  %1085 = vdwg.mxu0
  %v1086 = vxor.u32 %v1083, 2147483648
  %v1087 = vmul.f32 %v1086, 1.442695
  %v1088 = vpow.pop %v1087
  %v1089 = vadd.f32 %v1088, 1.0
  %v1090 = vrcp.pop %v1089
  %v1091 = vmul.f32 1.0, %v1090
  %v1092 = vtanh.pop %v1083
  %v1093 = vsel %vm47, %v1091, %v1092
  %v1094 = vmul.f32 %v1093, %v893
  %1096 = vrot.lane.b32.xlu0 %v1093, 32
  %v1097 = vpop.permute.xlu0 %1096
  %v1099 = vmul.f32 %v1093, %v1097
  %1101 = vrot.lane.b32.xlu0 %v1099, 32
  %v1102 = vpop.permute.xlu0 %1101
  %v1104 = vadd.f32 %v1094, %v1102
  %v1105 = vtanh.pop %v1104
  %1107 = vrot.lane.b32.xlu0 %v1105, 32
  %v1108 = vpop.permute.xlu0 %1107
  %v1110 = vmul.f32 %v1093, %v1108
  %s1111 = scalar_lea.vmem %s0, 40
  %v1112 = vld [vmem:[%s1111] sm:$0xff]
  %1113 = vrot.lane.b32.xlu0 %v1003, 80
  %v1114 = vpop.permute.xlu0 %1113
  %v1116 = vsel %vm49, %v1112, %v1114
  %v1118 = vsel %vm57, %v1116, 0
  %1120 = vmatprep.subr.mxu0 0.0
  %1121 = vmatpush1.msra.mxu0 %v29
  %1122 = vmatprep.subr.mxu0 0.0
  %1123 = vmatpush1.msra.mxu0 %v30
  %1124 = vmatprep.subr.mxu0 0.0
  %1125 = vmatpush1.msra.mxu0 %v31
  %1126 = vmatprep.subr.mxu0 0.0
  %1127 = vmatpush1.msra.mxu0 %v32
  %1128 = vmatprep.subr.mxu0 0.0
  %1129 = vmatpush1.msra.mxu0 %v33
  %1130 = vmatprep.subr.mxu0 0.0
  %1131 = vmatpush1.msra.mxu0 %v34
  %1132 = vmatprep.subr.mxu0 0.0
  %1133 = vmatpush1.msra.mxu0 0.0
  %1134 = vmatprep.subr.mxu0 0.0
  %1135 = vmatpush1.msra.mxu0 0.0
  %1136 = vmatprep.subr.mxu0 0.0
  %1137 = vmatpush1.msra.mxu0 0.0
  %1138 = vmatprep.subr.mxu0 0.0
  %1139 = vmatpush1.msra.mxu0 0.0
  %1140 = vmatprep.subr.mxu0 0.0
  %1141 = vmatpush1.msra.mxu0 0.0
  %1142 = vmatprep.subr.mxu0 0.0
  %1143 = vmatpush1.msra.mxu0 0.0
  %1144 = vmatprep.subr.mxu0 0.0
  %1145 = vmatpush1.msra.mxu0 0.0
  %1146 = vmatprep.subr.mxu0 0.0
  %1147 = vmatpush1.msra.mxu0 0.0
  %1148 = vmatprep.subr.mxu0 0.0
  %1149 = vmatpush1.msra.mxu0 0.0
  %1150 = vmatprep.subr.mxu0 0.0
  %1151 = vmatpush1.msra.mxu0 0.0
  %1152 = vmatprep.subr.mxu0 0.0
  %1153 = vmatpush1.msra.mxu0 0.0
  %1154 = vmatprep.subr.mxu0 0.0
  %1155 = vmatpush1.msra.mxu0 0.0
  %1156 = vmatprep.subr.mxu0 0.0
  %1157 = vmatpush1.msra.mxu0 0.0
  %1158 = vmatprep.subr.mxu0 0.0
  %1159 = vmatpush1.msra.mxu0 0.0
  %1160 = vmatprep.subr.mxu0 0.0
  %1161 = vmatpush1.msra.mxu0 0.0
  %1162 = vmatprep.subr.mxu0 0.0
  %1163 = vmatpush1.msra.mxu0 0.0
  %1164 = vmatprep.subr.mxu0 0.0
  %1165 = vmatpush1.msra.mxu0 0.0
  %1166 = vmatprep.subr.mxu0 0.0
  %1167 = vmatpush1.msra.mxu0 0.0
  %1168 = vmatprep.subr.mxu0 0.0
  %1169 = vmatpush1.msra.mxu0 0.0
  %1170 = vmatprep.subr.mxu0 0.0
  %1171 = vmatpush1.msra.mxu0 0.0
  %1172 = vmatprep.subr.mxu0 0.0
  %1173 = vmatpush1.msra.mxu0 0.0
  %1174 = vmatprep.subr.mxu0 0.0
  %1175 = vmatpush1.msra.mxu0 0.0
  %1176 = vmatprep.subr.mxu0 0.0
  %1177 = vmatpush1.msra.mxu0 0.0
  %1178 = vmatprep.subr.mxu0 0.0
  %1179 = vmatpush1.msra.mxu0 0.0
  %1180 = vmatprep.subr.mxu0 0.0
  %1181 = vmatpush1.msra.mxu0 0.0
  %1182 = vmatprep.subr.mxu0 0.0
  %1183 = vmatpush1.msra.mxu0 0.0
  %1184 = vmatprep.mubr.f32.mxu0 0.0
  %1185 = vmatmul.mubr.f32.gmra.mrb[0].mxu0 %v1118
  %v1186 = vpop.f32.mrb[0].mxu0
  %v1187 = vadd.f32 %v55, %v1186
  %v1188 = vpop.f32.mrb[0].mxu0
  %1189 = vdwg.mxu0
  %v1190 = vxor.u32 %v1187, 2147483648
  %v1191 = vmul.f32 %v1190, 1.442695
  %v1192 = vpow.pop %v1191
  %v1193 = vadd.f32 %v1192, 1.0
  %v1194 = vrcp.pop %v1193
  %v1195 = vmul.f32 1.0, %v1194
  %v1196 = vtanh.pop %v1187
  %v1197 = vsel %vm47, %v1195, %v1196
  %v1198 = vmul.f32 %v1197, %v997
  %1200 = vrot.lane.b32.xlu0 %v1197, 32
  %v1201 = vpop.permute.xlu0 %1200
  %v1203 = vmul.f32 %v1197, %v1201
  %1205 = vrot.lane.b32.xlu0 %v1203, 32
  %v1206 = vpop.permute.xlu0 %1205
  %v1208 = vadd.f32 %v1198, %v1206
  %v1209 = vtanh.pop %v1208
  %1211 = vrot.lane.b32.xlu0 %v1209, 32
  %v1212 = vpop.permute.xlu0 %1211
  %v1214 = vmul.f32 %v1197, %v1212
  %1216 = vrot.lane.b32.xlu0 %v1214, 64
  %v1217 = vpop.permute.xlu0 %1216
  %1220 = vrot.lane.b32.xlu0 %v1110, 96
  %v1221 = vpop.permute.xlu0 %1220
  %v1223 = vsel %vm160, %v1217, %v1221
  %v1225 = vsel %vm168, %v1223, 0
  %1227 = vmatprep.subr.mxu0 0.0
  %1228 = vmatpush1.msra.mxu0 %v36
  %1229 = vmatprep.subr.mxu0 0.0
  %1230 = vmatpush1.msra.mxu0 %v37
  %1231 = vmatprep.subr.mxu0 0.0
  %1232 = vmatpush1.msra.mxu0 %v38
  %1233 = vmatprep.subr.mxu0 0.0
  %1234 = vmatpush1.msra.mxu0 %v39
  %1235 = vmatprep.subr.mxu0 0.0
  %1236 = vmatpush1.msra.mxu0 %v40
  %1237 = vmatprep.subr.mxu0 0.0
  %1238 = vmatpush1.msra.mxu0 %v41
  %1239 = vmatprep.subr.mxu0 0.0
  %1240 = vmatpush1.msra.mxu0 %v42
  %1241 = vmatprep.subr.mxu0 0.0
  %1242 = vmatpush1.msra.mxu0 %v43
  %1243 = vmatprep.subr.mxu0 0.0
  %1244 = vmatpush1.msra.mxu0 0.0
  %1245 = vmatprep.subr.mxu0 0.0
  %1246 = vmatpush1.msra.mxu0 0.0
  %1247 = vmatprep.subr.mxu0 0.0
  %1248 = vmatpush1.msra.mxu0 0.0
  %1249 = vmatprep.subr.mxu0 0.0
  %1250 = vmatpush1.msra.mxu0 0.0
  %1251 = vmatprep.subr.mxu0 0.0
  %1252 = vmatpush1.msra.mxu0 0.0
  %1253 = vmatprep.subr.mxu0 0.0
  %1254 = vmatpush1.msra.mxu0 0.0
  %1255 = vmatprep.subr.mxu0 0.0
  %1256 = vmatpush1.msra.mxu0 0.0
  %1257 = vmatprep.subr.mxu0 0.0
  %1258 = vmatpush1.msra.mxu0 0.0
  %1259 = vmatprep.subr.mxu0 0.0
  %1260 = vmatpush1.msra.mxu0 0.0
  %1261 = vmatprep.subr.mxu0 0.0
  %1262 = vmatpush1.msra.mxu0 0.0
  %1263 = vmatprep.subr.mxu0 0.0
  %1264 = vmatpush1.msra.mxu0 0.0
  %1265 = vmatprep.subr.mxu0 0.0
  %1266 = vmatpush1.msra.mxu0 0.0
  %1267 = vmatprep.subr.mxu0 0.0
  %1268 = vmatpush1.msra.mxu0 0.0
  %1269 = vmatprep.subr.mxu0 0.0
  %1270 = vmatpush1.msra.mxu0 0.0
  %1271 = vmatprep.subr.mxu0 0.0
  %1272 = vmatpush1.msra.mxu0 0.0
  %1273 = vmatprep.subr.mxu0 0.0
  %1274 = vmatpush1.msra.mxu0 0.0
  %1275 = vmatprep.subr.mxu0 0.0
  %1276 = vmatpush1.msra.mxu0 0.0
  %1277 = vmatprep.subr.mxu0 0.0
  %1278 = vmatpush1.msra.mxu0 0.0
  %1279 = vmatprep.subr.mxu0 0.0
  %1280 = vmatpush1.msra.mxu0 0.0
  %1281 = vmatprep.subr.mxu0 0.0
  %1282 = vmatpush1.msra.mxu0 0.0
  %1283 = vmatprep.subr.mxu0 0.0
  %1284 = vmatpush1.msra.mxu0 0.0
  %1285 = vmatprep.subr.mxu0 0.0
  %1286 = vmatpush1.msra.mxu0 0.0
  %1287 = vmatprep.subr.mxu0 0.0
  %1288 = vmatpush1.msra.mxu0 0.0
  %1289 = vmatprep.subr.mxu0 0.0
  %1290 = vmatpush1.msra.mxu0 0.0
  %1291 = vmatprep.mubr.f32.mxu0 0.0
  %1292 = vmatmul.mubr.f32.gmra.mrb[0].mxu0 %v1225
  %v1293 = vpop.f32.mrb[0].mxu0
  %v1294 = vadd.f32 %v166, %v1293
  %v1295 = vpop.f32.mrb[0].mxu0
  %1296 = vdwg.mxu0
  %v1297 = vxor.u32 %v1294, 2147483648
  %v1298 = vmul.f32 %v1297, 1.442695
  %v1299 = vpow.pop %v1298
  %v1300 = vadd.f32 %v1299, 1.0
  %v1301 = vrcp.pop %v1300
  %v1302 = vmul.f32 1.0, %v1301
  %v1303 = vtanh.pop %v1294
  %v1304 = vsel %vm47, %v1302, %v1303
  %v1305 = vmul.f32 %v1304, %v1104
  %1307 = vrot.lane.b32.xlu0 %v1304, 32
  %v1308 = vpop.permute.xlu0 %1307
  %v1310 = vmul.f32 %v1304, %v1308
  %1312 = vrot.lane.b32.xlu0 %v1310, 32
  %v1313 = vpop.permute.xlu0 %1312
  %v1315 = vadd.f32 %v1305, %v1313
  %v1316 = vtanh.pop %v1315
  %1318 = vrot.lane.b32.xlu0 %v1316, 32
  %v1319 = vpop.permute.xlu0 %1318
  %v1321 = vmul.f32 %v1304, %v1319
  %s1322 = scalar_lea.vmem %s0, 48
  %v1323 = vld [vmem:[%s1322] sm:$0xff]
  %1324 = vrot.lane.b32.xlu0 %v1214, 80
  %v1325 = vpop.permute.xlu0 %1324
  %v1327 = vsel %vm49, %v1323, %v1325
  %v1329 = vsel %vm57, %v1327, 0
  %1331 = vmatprep.subr.mxu0 0.0
  %1332 = vmatpush1.msra.mxu0 %v29
  %1333 = vmatprep.subr.mxu0 0.0
  %1334 = vmatpush1.msra.mxu0 %v30
  %1335 = vmatprep.subr.mxu0 0.0
  %1336 = vmatpush1.msra.mxu0 %v31
  %1337 = vmatprep.subr.mxu0 0.0
  %1338 = vmatpush1.msra.mxu0 %v32
  %1339 = vmatprep.subr.mxu0 0.0
  %1340 = vmatpush1.msra.mxu0 %v33
  %1341 = vmatprep.subr.mxu0 0.0
  %1342 = vmatpush1.msra.mxu0 %v34
  %1343 = vmatprep.subr.mxu0 0.0
  %1344 = vmatpush1.msra.mxu0 0.0
  %1345 = vmatprep.subr.mxu0 0.0
  %1346 = vmatpush1.msra.mxu0 0.0
  %1347 = vmatprep.subr.mxu0 0.0
  %1348 = vmatpush1.msra.mxu0 0.0
  %1349 = vmatprep.subr.mxu0 0.0
  %1350 = vmatpush1.msra.mxu0 0.0
  %1351 = vmatprep.subr.mxu0 0.0
  %1352 = vmatpush1.msra.mxu0 0.0
  %1353 = vmatprep.subr.mxu0 0.0
  %1354 = vmatpush1.msra.mxu0 0.0
  %1355 = vmatprep.subr.mxu0 0.0
  %1356 = vmatpush1.msra.mxu0 0.0
  %1357 = vmatprep.subr.mxu0 0.0
  %1358 = vmatpush1.msra.mxu0 0.0
  %1359 = vmatprep.subr.mxu0 0.0
  %1360 = vmatpush1.msra.mxu0 0.0
  %1361 = vmatprep.subr.mxu0 0.0
  %1362 = vmatpush1.msra.mxu0 0.0
  %1363 = vmatprep.subr.mxu0 0.0
  %1364 = vmatpush1.msra.mxu0 0.0
  %1365 = vmatprep.subr.mxu0 0.0
  %1366 = vmatpush1.msra.mxu0 0.0
  %1367 = vmatprep.subr.mxu0 0.0
  %1368 = vmatpush1.msra.mxu0 0.0
  %1369 = vmatprep.subr.mxu0 0.0
  %1370 = vmatpush1.msra.mxu0 0.0
  %1371 = vmatprep.subr.mxu0 0.0
  %1372 = vmatpush1.msra.mxu0 0.0
  %1373 = vmatprep.subr.mxu0 0.0
  %1374 = vmatpush1.msra.mxu0 0.0
  %1375 = vmatprep.subr.mxu0 0.0
  %1376 = vmatpush1.msra.mxu0 0.0
  %1377 = vmatprep.subr.mxu0 0.0
  %1378 = vmatpush1.msra.mxu0 0.0
  %1379 = vmatprep.subr.mxu0 0.0
  %1380 = vmatpush1.msra.mxu0 0.0
  %1381 = vmatprep.subr.mxu0 0.0
  %1382 = vmatpush1.msra.mxu0 0.0
  %1383 = vmatprep.subr.mxu0 0.0
  %1384 = vmatpush1.msra.mxu0 0.0
  %1385 = vmatprep.subr.mxu0 0.0
  %1386 = vmatpush1.msra.mxu0 0.0
  %1387 = vmatprep.subr.mxu0 0.0
  %1388 = vmatpush1.msra.mxu0 0.0
  %1389 = vmatprep.subr.mxu0 0.0
  %1390 = vmatpush1.msra.mxu0 0.0
  %1391 = vmatprep.subr.mxu0 0.0
  %1392 = vmatpush1.msra.mxu0 0.0
  %1393 = vmatprep.subr.mxu0 0.0
  %1394 = vmatpush1.msra.mxu0 0.0
  %1395 = vmatprep.mubr.f32.mxu0 0.0
  %1396 = vmatmul.mubr.f32.gmra.mrb[0].mxu0 %v1329
  %v1397 = vpop.f32.mrb[0].mxu0
  %v1398 = vadd.f32 %v55, %v1397
  %v1399 = vpop.f32.mrb[0].mxu0
  %1400 = vdwg.mxu0
  %v1401 = vxor.u32 %v1398, 2147483648
  %v1402 = vmul.f32 %v1401, 1.442695
  %v1403 = vpow.pop %v1402
  %v1404 = vadd.f32 %v1403, 1.0
  %v1405 = vrcp.pop %v1404
  %v1406 = vmul.f32 1.0, %v1405
  %v1407 = vtanh.pop %v1398
  %v1408 = vsel %vm47, %v1406, %v1407
  %v1409 = vmul.f32 %v1408, %v1208
  %1411 = vrot.lane.b32.xlu0 %v1408, 32
  %v1412 = vpop.permute.xlu0 %1411
  %v1414 = vmul.f32 %v1408, %v1412
  %1416 = vrot.lane.b32.xlu0 %v1414, 32
  %v1417 = vpop.permute.xlu0 %1416
  %v1419 = vadd.f32 %v1409, %v1417
  %v1420 = vtanh.pop %v1419
  %1422 = vrot.lane.b32.xlu0 %v1420, 32
  %v1423 = vpop.permute.xlu0 %1422
  %v1425 = vmul.f32 %v1408, %v1423
  %1427 = vrot.lane.b32.xlu0 %v1425, 64
  %v1428 = vpop.permute.xlu0 %1427
  %1431 = vrot.lane.b32.xlu0 %v1321, 96
  %v1432 = vpop.permute.xlu0 %1431
  %v1434 = vsel %vm160, %v1428, %v1432
  %v1436 = vsel %vm168, %v1434, 0
  %1438 = vmatprep.subr.mxu0 0.0
  %1439 = vmatpush1.msra.mxu0 %v36
  %1440 = vmatprep.subr.mxu0 0.0
  %1441 = vmatpush1.msra.mxu0 %v37
  %1442 = vmatprep.subr.mxu0 0.0
  %1443 = vmatpush1.msra.mxu0 %v38
  %1444 = vmatprep.subr.mxu0 0.0
  %1445 = vmatpush1.msra.mxu0 %v39
  %1446 = vmatprep.subr.mxu0 0.0
  %1447 = vmatpush1.msra.mxu0 %v40
  %1448 = vmatprep.subr.mxu0 0.0
  %1449 = vmatpush1.msra.mxu0 %v41
  %1450 = vmatprep.subr.mxu0 0.0
  %1451 = vmatpush1.msra.mxu0 %v42
  %1452 = vmatprep.subr.mxu0 0.0
  %1453 = vmatpush1.msra.mxu0 %v43
  %1454 = vmatprep.subr.mxu0 0.0
  %1455 = vmatpush1.msra.mxu0 0.0
  %1456 = vmatprep.subr.mxu0 0.0
  %1457 = vmatpush1.msra.mxu0 0.0
  %1458 = vmatprep.subr.mxu0 0.0
  %1459 = vmatpush1.msra.mxu0 0.0
  %1460 = vmatprep.subr.mxu0 0.0
  %1461 = vmatpush1.msra.mxu0 0.0
  %1462 = vmatprep.subr.mxu0 0.0
  %1463 = vmatpush1.msra.mxu0 0.0
  %1464 = vmatprep.subr.mxu0 0.0
  %1465 = vmatpush1.msra.mxu0 0.0
  %1466 = vmatprep.subr.mxu0 0.0
  %1467 = vmatpush1.msra.mxu0 0.0
  %1468 = vmatprep.subr.mxu0 0.0
  %1469 = vmatpush1.msra.mxu0 0.0
  %1470 = vmatprep.subr.mxu0 0.0
  %1471 = vmatpush1.msra.mxu0 0.0
  %1472 = vmatprep.subr.mxu0 0.0
  %1473 = vmatpush1.msra.mxu0 0.0
  %1474 = vmatprep.subr.mxu0 0.0
  %1475 = vmatpush1.msra.mxu0 0.0
  %1476 = vmatprep.subr.mxu0 0.0
  %1477 = vmatpush1.msra.mxu0 0.0
  %1478 = vmatprep.subr.mxu0 0.0
  %1479 = vmatpush1.msra.mxu0 0.0
  %1480 = vmatprep.subr.mxu0 0.0
  %1481 = vmatpush1.msra.mxu0 0.0
  %1482 = vmatprep.subr.mxu0 0.0
  %1483 = vmatpush1.msra.mxu0 0.0
  %1484 = vmatprep.subr.mxu0 0.0
  %1485 = vmatpush1.msra.mxu0 0.0
  %1486 = vmatprep.subr.mxu0 0.0
  %1487 = vmatpush1.msra.mxu0 0.0
  %1488 = vmatprep.subr.mxu0 0.0
  %1489 = vmatpush1.msra.mxu0 0.0
  %1490 = vmatprep.subr.mxu0 0.0
  %1491 = vmatpush1.msra.mxu0 0.0
  %1492 = vmatprep.subr.mxu0 0.0
  %1493 = vmatpush1.msra.mxu0 0.0
  %1494 = vmatprep.subr.mxu0 0.0
  %1495 = vmatpush1.msra.mxu0 0.0
  %1496 = vmatprep.subr.mxu0 0.0
  %1497 = vmatpush1.msra.mxu0 0.0
  %1498 = vmatprep.subr.mxu0 0.0
  %1499 = vmatpush1.msra.mxu0 0.0
  %1500 = vmatprep.subr.mxu0 0.0
  %1501 = vmatpush1.msra.mxu0 0.0
  %1502 = vmatprep.mubr.f32.mxu0 0.0
  %1503 = vmatmul.mubr.f32.gmra.mrb[0].mxu0 %v1436
  %v1504 = vpop.f32.mrb[0].mxu0
  %v1505 = vadd.f32 %v166, %v1504
  %v1506 = vpop.f32.mrb[0].mxu0
  %1507 = vdwg.mxu0
  %v1508 = vxor.u32 %v1505, 2147483648
  %v1509 = vmul.f32 %v1508, 1.442695
  %v1510 = vpow.pop %v1509
  %v1511 = vadd.f32 %v1510, 1.0
  %v1512 = vrcp.pop %v1511
  %v1513 = vmul.f32 1.0, %v1512
  %v1514 = vtanh.pop %v1505
  %v1515 = vsel %vm47, %v1513, %v1514
  %v1516 = vmul.f32 %v1515, %v1315
  %1518 = vrot.lane.b32.xlu0 %v1515, 32
  %v1519 = vpop.permute.xlu0 %1518
  %v1521 = vmul.f32 %v1515, %v1519
  %1523 = vrot.lane.b32.xlu0 %v1521, 32
  %v1524 = vpop.permute.xlu0 %1523
  %v1526 = vadd.f32 %v1516, %v1524
  %v1527 = vtanh.pop %v1526
  %1529 = vrot.lane.b32.xlu0 %v1527, 32
  %v1530 = vpop.permute.xlu0 %1529
  %v1532 = vmul.f32 %v1515, %v1530
  %s1533 = scalar_lea.vmem %s0, 56
  %v1534 = vld [vmem:[%s1533] sm:$0xff]
  %1535 = vrot.lane.b32.xlu0 %v1425, 80
  %v1536 = vpop.permute.xlu0 %1535
  %v1538 = vsel %vm49, %v1534, %v1536
  %v1540 = vsel %vm57, %v1538, 0
  %1542 = vmatprep.subr.mxu0 0.0
  %1543 = vmatpush1.msra.mxu0 %v29
  %1544 = vmatprep.subr.mxu0 0.0
  %1545 = vmatpush1.msra.mxu0 %v30
  %1546 = vmatprep.subr.mxu0 0.0
  %1547 = vmatpush1.msra.mxu0 %v31
  %1548 = vmatprep.subr.mxu0 0.0
  %1549 = vmatpush1.msra.mxu0 %v32
  %1550 = vmatprep.subr.mxu0 0.0
  %1551 = vmatpush1.msra.mxu0 %v33
  %1552 = vmatprep.subr.mxu0 0.0
  %1553 = vmatpush1.msra.mxu0 %v34
  %1554 = vmatprep.subr.mxu0 0.0
  %1555 = vmatpush1.msra.mxu0 0.0
  %1556 = vmatprep.subr.mxu0 0.0
  %1557 = vmatpush1.msra.mxu0 0.0
  %1558 = vmatprep.subr.mxu0 0.0
  %1559 = vmatpush1.msra.mxu0 0.0
  %1560 = vmatprep.subr.mxu0 0.0
  %1561 = vmatpush1.msra.mxu0 0.0
  %1562 = vmatprep.subr.mxu0 0.0
  %1563 = vmatpush1.msra.mxu0 0.0
  %1564 = vmatprep.subr.mxu0 0.0
  %1565 = vmatpush1.msra.mxu0 0.0
  %1566 = vmatprep.subr.mxu0 0.0
  %1567 = vmatpush1.msra.mxu0 0.0
  %1568 = vmatprep.subr.mxu0 0.0
  %1569 = vmatpush1.msra.mxu0 0.0
  %1570 = vmatprep.subr.mxu0 0.0
  %1571 = vmatpush1.msra.mxu0 0.0
  %1572 = vmatprep.subr.mxu0 0.0
  %1573 = vmatpush1.msra.mxu0 0.0
  %1574 = vmatprep.subr.mxu0 0.0
  %1575 = vmatpush1.msra.mxu0 0.0
  %1576 = vmatprep.subr.mxu0 0.0
  %1577 = vmatpush1.msra.mxu0 0.0
  %1578 = vmatprep.subr.mxu0 0.0
  %1579 = vmatpush1.msra.mxu0 0.0
  %1580 = vmatprep.subr.mxu0 0.0
  %1581 = vmatpush1.msra.mxu0 0.0
  %1582 = vmatprep.subr.mxu0 0.0
  %1583 = vmatpush1.msra.mxu0 0.0
  %1584 = vmatprep.subr.mxu0 0.0
  %1585 = vmatpush1.msra.mxu0 0.0
  %1586 = vmatprep.subr.mxu0 0.0
  %1587 = vmatpush1.msra.mxu0 0.0
  %1588 = vmatprep.subr.mxu0 0.0
  %1589 = vmatpush1.msra.mxu0 0.0
  %1590 = vmatprep.subr.mxu0 0.0
  %1591 = vmatpush1.msra.mxu0 0.0
  %1592 = vmatprep.subr.mxu0 0.0
  %1593 = vmatpush1.msra.mxu0 0.0
  %1594 = vmatprep.subr.mxu0 0.0
  %1595 = vmatpush1.msra.mxu0 0.0
  %1596 = vmatprep.subr.mxu0 0.0
  %1597 = vmatpush1.msra.mxu0 0.0
  %1598 = vmatprep.subr.mxu0 0.0
  %1599 = vmatpush1.msra.mxu0 0.0
  %1600 = vmatprep.subr.mxu0 0.0
  %1601 = vmatpush1.msra.mxu0 0.0
  %1602 = vmatprep.subr.mxu0 0.0
  %1603 = vmatpush1.msra.mxu0 0.0
  %1604 = vmatprep.subr.mxu0 0.0
  %1605 = vmatpush1.msra.mxu0 0.0
  %1606 = vmatprep.mubr.f32.mxu0 0.0
  %1607 = vmatmul.mubr.f32.gmra.mrb[0].mxu0 %v1540
  %v1608 = vpop.f32.mrb[0].mxu0
  %v1609 = vadd.f32 %v55, %v1608
  %v1610 = vpop.f32.mrb[0].mxu0
  %1611 = vdwg.mxu0
  %v1612 = vxor.u32 %v1609, 2147483648
  %v1613 = vmul.f32 %v1612, 1.442695
  %v1614 = vpow.pop %v1613
  %v1615 = vadd.f32 %v1614, 1.0
  %v1616 = vrcp.pop %v1615
  %v1617 = vmul.f32 1.0, %v1616
  %v1618 = vtanh.pop %v1609
  %v1619 = vsel %vm47, %v1617, %v1618
  %v1620 = vmul.f32 %v1619, %v1419
  %1622 = vrot.lane.b32.xlu0 %v1619, 32
  %v1623 = vpop.permute.xlu0 %1622
  %v1625 = vmul.f32 %v1619, %v1623
  %1627 = vrot.lane.b32.xlu0 %v1625, 32
  %v1628 = vpop.permute.xlu0 %1627
  %v1630 = vadd.f32 %v1620, %v1628
  %v1631 = vtanh.pop %v1630
  %1633 = vrot.lane.b32.xlu0 %v1631, 32
  %v1634 = vpop.permute.xlu0 %1633
  %v1636 = vmul.f32 %v1619, %v1634
  %1638 = vrot.lane.b32.xlu0 %v1636, 64
  %v1639 = vpop.permute.xlu0 %1638
  %1642 = vrot.lane.b32.xlu0 %v1532, 96
  %v1643 = vpop.permute.xlu0 %1642
  %v1645 = vsel %vm160, %v1639, %v1643
  %v1647 = vsel %vm168, %v1645, 0
  %1649 = vmatprep.subr.mxu0 0.0
  %1650 = vmatpush1.msra.mxu0 %v36
  %1651 = vmatprep.subr.mxu0 0.0
  %1652 = vmatpush1.msra.mxu0 %v37
  %1653 = vmatprep.subr.mxu0 0.0
  %1654 = vmatpush1.msra.mxu0 %v38
  %1655 = vmatprep.subr.mxu0 0.0
  %1656 = vmatpush1.msra.mxu0 %v39
  %1657 = vmatprep.subr.mxu0 0.0
  %1658 = vmatpush1.msra.mxu0 %v40
  %1659 = vmatprep.subr.mxu0 0.0
  %1660 = vmatpush1.msra.mxu0 %v41
  %1661 = vmatprep.subr.mxu0 0.0
  %1662 = vmatpush1.msra.mxu0 %v42
  %1663 = vmatprep.subr.mxu0 0.0
  %1664 = vmatpush1.msra.mxu0 %v43
  %1665 = vmatprep.subr.mxu0 0.0
  %1666 = vmatpush1.msra.mxu0 0.0
  %1667 = vmatprep.subr.mxu0 0.0
  %1668 = vmatpush1.msra.mxu0 0.0
  %1669 = vmatprep.subr.mxu0 0.0
  %1670 = vmatpush1.msra.mxu0 0.0
  %1671 = vmatprep.subr.mxu0 0.0
  %1672 = vmatpush1.msra.mxu0 0.0
  %1673 = vmatprep.subr.mxu0 0.0
  %1674 = vmatpush1.msra.mxu0 0.0
  %1675 = vmatprep.subr.mxu0 0.0
  %1676 = vmatpush1.msra.mxu0 0.0
  %1677 = vmatprep.subr.mxu0 0.0
  %1678 = vmatpush1.msra.mxu0 0.0
  %1679 = vmatprep.subr.mxu0 0.0
  %1680 = vmatpush1.msra.mxu0 0.0
  %1681 = vmatprep.subr.mxu0 0.0
  %1682 = vmatpush1.msra.mxu0 0.0
  %1683 = vmatprep.subr.mxu0 0.0
  %1684 = vmatpush1.msra.mxu0 0.0
  %1685 = vmatprep.subr.mxu0 0.0
  %1686 = vmatpush1.msra.mxu0 0.0
  %1687 = vmatprep.subr.mxu0 0.0
  %1688 = vmatpush1.msra.mxu0 0.0
  %1689 = vmatprep.subr.mxu0 0.0
  %1690 = vmatpush1.msra.mxu0 0.0
  %1691 = vmatprep.subr.mxu0 0.0
  %1692 = vmatpush1.msra.mxu0 0.0
  %1693 = vmatprep.subr.mxu0 0.0
  %1694 = vmatpush1.msra.mxu0 0.0
  %1695 = vmatprep.subr.mxu0 0.0
  %1696 = vmatpush1.msra.mxu0 0.0
  %1697 = vmatprep.subr.mxu0 0.0
  %1698 = vmatpush1.msra.mxu0 0.0
  %1699 = vmatprep.subr.mxu0 0.0
  %1700 = vmatpush1.msra.mxu0 0.0
  %1701 = vmatprep.subr.mxu0 0.0
  %1702 = vmatpush1.msra.mxu0 0.0
  %1703 = vmatprep.subr.mxu0 0.0
  %1704 = vmatpush1.msra.mxu0 0.0
  %1705 = vmatprep.subr.mxu0 0.0
  %1706 = vmatpush1.msra.mxu0 0.0
  %1707 = vmatprep.subr.mxu0 0.0
  %1708 = vmatpush1.msra.mxu0 0.0
  %1709 = vmatprep.subr.mxu0 0.0
  %1710 = vmatpush1.msra.mxu0 0.0
  %1711 = vmatprep.subr.mxu0 0.0
  %1712 = vmatpush1.msra.mxu0 0.0
  %1713 = vmatprep.mubr.f32.mxu0 0.0
  %1714 = vmatmul.mubr.f32.gmra.mrb[0].mxu0 %v1647
  %v1715 = vpop.f32.mrb[0].mxu0
  %v1716 = vadd.f32 %v166, %v1715
  %v1717 = vpop.f32.mrb[0].mxu0
  %1718 = vdwg.mxu0
  %v1719 = vxor.u32 %v1716, 2147483648
  %v1720 = vmul.f32 %v1719, 1.442695
  %v1721 = vpow.pop %v1720
  %v1722 = vadd.f32 %v1721, 1.0
  %v1723 = vrcp.pop %v1722
  %v1724 = vmul.f32 1.0, %v1723
  %v1725 = vtanh.pop %v1716
  %v1726 = vsel %vm47, %v1724, %v1725
  %v1727 = vmul.f32 %v1726, %v1526
  %1729 = vrot.lane.b32.xlu0 %v1726, 32
  %v1730 = vpop.permute.xlu0 %1729
  %v1732 = vmul.f32 %v1726, %v1730
  %1734 = vrot.lane.b32.xlu0 %v1732, 32
  %v1735 = vpop.permute.xlu0 %1734
  %v1737 = vadd.f32 %v1727, %v1735
  %v1738 = vtanh.pop %v1737
  %1740 = vrot.lane.b32.xlu0 %v1738, 32
  %v1741 = vpop.permute.xlu0 %1740
  %v1743 = vmul.f32 %v1726, %v1741
  %v1744 = vld [vmem:[%s5] sm:$0xff]
  %v1745 = vld [vmem:[%s5 + $0x8] sm:$0xff]
  %v1746 = vld [vmem:[%s5 + $0x10] sm:$0xff]
  %v1747 = vld [vmem:[%s5 + $0x18] sm:$0xff]
  %v1748 = vld [vmem:[%s6] sm:$0x1]
  %v1750 = vlaneseq
  %v1751 = vshrl.u32 %v1750, 7
  %v1752 = vsub.s32 0, %v1751
  %v1753 = vrot.slane %v1748, %v1752
  %1756 = vrot.lane.b32.xlu0 %v1743, 64
  %v1757 = vpop.permute.xlu0 %1756
  %v1758 = vsel %vm160, %v1757, 0
  %1760 = vmatprep.subr.mxu0 0.0
  %1761 = vmatpush1.msra.mxu0 %v1744
  %1762 = vmatprep.subr.mxu0 0.0
  %1763 = vmatpush1.msra.mxu0 %v1745
  %1764 = vmatprep.subr.mxu0 0.0
  %1765 = vmatpush1.msra.mxu0 %v1746
  %1766 = vmatprep.subr.mxu0 0.0
  %1767 = vmatpush1.msra.mxu0 %v1747
  %1768 = vmatprep.subr.mxu0 0.0
  %1769 = vmatpush1.msra.mxu0 0.0
  %1770 = vmatprep.subr.mxu0 0.0
  %1771 = vmatpush1.msra.mxu0 0.0
  %1772 = vmatprep.subr.mxu0 0.0
  %1773 = vmatpush1.msra.mxu0 0.0
  %1774 = vmatprep.subr.mxu0 0.0
  %1775 = vmatpush1.msra.mxu0 0.0
  %1776 = vmatprep.subr.mxu0 0.0
  %1777 = vmatpush1.msra.mxu0 0.0
  %1778 = vmatprep.subr.mxu0 0.0
  %1779 = vmatpush1.msra.mxu0 0.0
  %1780 = vmatprep.subr.mxu0 0.0
  %1781 = vmatpush1.msra.mxu0 0.0
  %1782 = vmatprep.subr.mxu0 0.0
  %1783 = vmatpush1.msra.mxu0 0.0
  %1784 = vmatprep.subr.mxu0 0.0
  %1785 = vmatpush1.msra.mxu0 0.0
  %1786 = vmatprep.subr.mxu0 0.0
  %1787 = vmatpush1.msra.mxu0 0.0
  %1788 = vmatprep.subr.mxu0 0.0
  %1789 = vmatpush1.msra.mxu0 0.0
  %1790 = vmatprep.subr.mxu0 0.0
  %1791 = vmatpush1.msra.mxu0 0.0
  %1792 = vmatprep.subr.mxu0 0.0
  %1793 = vmatpush1.msra.mxu0 0.0
  %1794 = vmatprep.subr.mxu0 0.0
  %1795 = vmatpush1.msra.mxu0 0.0
  %1796 = vmatprep.subr.mxu0 0.0
  %1797 = vmatpush1.msra.mxu0 0.0
  %1798 = vmatprep.subr.mxu0 0.0
  %1799 = vmatpush1.msra.mxu0 0.0
  %1800 = vmatprep.subr.mxu0 0.0
  %1801 = vmatpush1.msra.mxu0 0.0
  %1802 = vmatprep.subr.mxu0 0.0
  %1803 = vmatpush1.msra.mxu0 0.0
  %1804 = vmatprep.subr.mxu0 0.0
  %1805 = vmatpush1.msra.mxu0 0.0
  %1806 = vmatprep.subr.mxu0 0.0
  %1807 = vmatpush1.msra.mxu0 0.0
  %1808 = vmatprep.subr.mxu0 0.0
  %1809 = vmatpush1.msra.mxu0 0.0
  %1810 = vmatprep.subr.mxu0 0.0
  %1811 = vmatpush1.msra.mxu0 0.0
  %1812 = vmatprep.subr.mxu0 0.0
  %1813 = vmatpush1.msra.mxu0 0.0
  %1814 = vmatprep.subr.mxu0 0.0
  %1815 = vmatpush1.msra.mxu0 0.0
  %1816 = vmatprep.subr.mxu0 0.0
  %1817 = vmatpush1.msra.mxu0 0.0
  %1818 = vmatprep.subr.mxu0 0.0
  %1819 = vmatpush1.msra.mxu0 0.0
  %1820 = vmatprep.subr.mxu0 0.0
  %1821 = vmatpush1.msra.mxu0 0.0
  %1822 = vmatprep.subr.mxu0 0.0
  %1823 = vmatpush1.msra.mxu0 0.0
  %1824 = vmatprep.mubr.f32.mxu0 0.0
  %1825 = vmatmul.mubr.f32.gmra.mrb[0].mxu0 %v1758
  %v1826 = vpop.f32.mrb[0].mxu0
  %v1827 = vadd.f32 %v1753, %v1826
  %v1828 = vpop.f32.mrb[0].mxu0
  %1829 = vdwg.mxu0
  %vm1830 = vcmask 64512
  %v1831 = vsel %vm1830, %v1827, -inf
  %1832 = vmax.xlane.f32.xlu0 %v1831
  %v1833 = vpop.xlane.xlu0 %1832
  %v1834 = vsub.f32 %v1827, %v1833
  %v1835 = vmul.f32 %v1834, 1.442695
  %v1836 = vpow.pop %v1835
  %v1837 = vsel %vm1830, %v1836, 0.0
  %1838 = vadd.xlane.f32.xlu0 %v1837
  %v1839 = vpop.xlane.xlu0 %1838
  %v1840 = vlog2.pop %v1839
  %v1841 = vmul.f32 %v1840, 0.6931472
  %v1842 = vsub.f32 %v1834, %v1841
  %1843 = vst.msk [vmem:[%s7] sm:$0xff] %vm1830, %v1842
  %1844 = vst.msk [vmem:[%s8] sm:$0xff] %vm160, %v1639
  %s1846 = scalar_lea.vmem %s8, 8
  %1847 = vst.msk [vmem:[%s1846] sm:$0xff] %vm160, %v1757
  %1849 = vrot.lane.b32.xlu0 %v1630, 96
  %v1850 = vpop.permute.xlu0 %1849
  %1852 = vst.msk [vmem:[%s9] sm:$0xff] %vm160, %v1850
  %1854 = vrot.lane.b32.xlu0 %v1737, 96
  %v1855 = vpop.permute.xlu0 %1854
  %s1857 = scalar_lea.vmem %s9, 8
  %1858 = vst.msk [vmem:[%s1857] sm:$0xff] %vm160, %v1855
  // Predicated region
  $region30: #{lstm_forward.1} parent=0 // pred_check
    _
  $region31: #{lstm_forward.1} parent=0 // pred_check_branch
    %1860 = sbr.rel (0) target = $region33
  $region32: #{lstm_forward.1} parent=0 // pred_region
    _
  $region33: #{lstm_forward.1} parent=0 // pred_fallthru
    _
  // Predicated region
  $region34: #{lstm_forward.1} parent=0 // pred_check
    _
  $region35: #{lstm_forward.1} parent=0 // pred_check_branch
    %1862 = sbr.rel (0) target = $region37
  $region36: #{lstm_forward.1} parent=0 // pred_region
    _
  $region37: #{lstm_forward.1} parent=0 // pred_fallthru
    _
  // Predicated region
  $region38: #{lstm_forward.1} parent=0 // pred_check
    _
  $region39: #{lstm_forward.1} parent=0 // pred_check_branch
    %1864 = sbr.rel (0) target = $region41
  $region40: #{lstm_forward.1} parent=0 // pred_region
    _
  $region41: #{lstm_forward.1} parent=0 // pred_fallthru
    _
  // Predicated region
  $region42: #{lstm_forward.1} parent=0 // pred_check
    _
  $region43: #{lstm_forward.1} parent=0 // pred_check_branch
    %1866 = sbr.rel (0) target = $region45
  $region44: #{lstm_forward.1} parent=0 // pred_region
    _
  $region45: #{lstm_forward.1} parent=0 // pred_fallthru
    _
  // Predicated region
  $region46: #{lstm_forward.1} parent=0 // pred_check
    _
  $region47: #{lstm_forward.1} parent=0 // pred_check_branch
    %1868 = sbr.rel (0) target = $region49
  $region48: #{lstm_forward.1} parent=0 // pred_region
    _
  $region49: #{lstm_forward.1} parent=0 // pred_fallthru
    _
  // Predicated region
  $region50: #{lstm_forward.1} parent=0 // pred_check
    _
  $region51: #{lstm_forward.1} parent=0 // pred_check_branch
    %1870 = sbr.rel (0) target = $region53
  $region52: #{lstm_forward.1} parent=0 // pred_region
    _
  $region53: #{lstm_forward.1} parent=0 // pred_fallthru
    _

</llo_original>
